<compile_context>
chip_gen: v6e
topology: v6e:2x2x1
jax: 0.10.0
libtpu: 0.0.40
codegen_flags: <defaults>
</compile_context>

<pallas_src>
import jax
import jax.numpy as jnp
from jax.experimental import pallas as pl
from jax.experimental.pallas import tpu as pltpu

NUM_EMBEDDINGS = 1000
EMBEDDING_DIM = 32          # D
EXPOSURE_DIM = 8
LANE = 128                  # vreg lane width
SUB = 8                     # vreg sublane count (gather granule rows)
E_PAD = 1024                # NUM_EMBEDDINGS padded up to a multiple of LANE
NUM_GROUPS = E_PAD // LANE  # 8


def _round_up(x, m):
    return (x + m - 1) // m * m


# --------------------------------------------------------------------------
# Primary kernel: gather + exposure FMA (no MXU, f32 end-to-end)
# --------------------------------------------------------------------------
def _gather_kernel(ids_ref, expo_ref, tab_ref, wecol_ref, out_ref):
    """Fused embedding lookup + exposure FMA.

    ids_ref:   (1, TILE_N)  int32    appearance ids (lane-dense)
    expo_ref:  (1, TILE_N)  float32  exposure values (lane-dense)
    tab_ref:   (8, 32, 128) float32  fused table, tab[g, d, l] = T[g*128 + l, d]
    wecol_ref: (32, 128)    float32  fused exposure row, broadcast along lanes
    out_ref:   (TILE_N, 32) float32
    """
    tile_n = out_ref.shape[0]
    wecol = wecol_ref[...]                                            # (32, 128)
    for c in range(tile_n // LANE):                                   # static unroll
        lo, hi = c * LANE, (c + 1) * LANE
        ids_c = jnp.clip(ids_ref[:, lo:hi], 0, NUM_EMBEDDINGS - 1)    # (1, 128) i32
        lane = jnp.broadcast_to(ids_c & (LANE - 1), (SUB, LANE))      # (8, 128)
        grp = jnp.broadcast_to(ids_c // LANE, (SUB, LANE))            # (8, 128)
        expo_c = expo_ref[:, lo:hi]                                   # (1, 128) f32

        parts = []
        for j in range(EMBEDDING_DIM // SUB):                         # 4 dim sub-chunks
            acc = None
            for g in range(NUM_GROUPS):                               # 8 groups of 128 rows
                slab = tab_ref[g, j * SUB:(j + 1) * SUB, :]           # (8, 128) f32
                cand = jnp.take_along_axis(slab, lane, axis=1)        # XLU lane gather
                acc = cand if acc is None else jnp.where(grp == g, cand, acc)
            parts.append(acc)                                         # (8, 128)
        out_t = jnp.concatenate(parts, axis=0)                        # (32, 128)  [dim, row]
        out_t = out_t + wecol * expo_c                                 # exposure FMA (VPU)
        out_ref[lo:hi, :] = jnp.transpose(out_t).astype(out_ref.dtype)


# --------------------------------------------------------------------------
# Fallback kernel: bf16 one-hot MXU lookup (only if dynamic-gather lowering
# is unavailable in this Mosaic build) — previous, slower design.
# --------------------------------------------------------------------------
def _onehot_kernel(ids_ref, expo_ref, tab_ref, werow_ref, bias_ref, out_ref):
    tile_n = out_ref.shape[0]
    ids = jnp.clip(ids_ref[...], 0, NUM_EMBEDDINGS - 1)               # (T, 1)
    col = jax.lax.broadcasted_iota(jnp.int32, (tile_n, E_PAD), 1)
    onehot = (col == ids).astype(jnp.bfloat16)
    app = jnp.dot(onehot, tab_ref[...], preferred_element_type=jnp.float32)
    out_ref[...] = (app + expo_ref[...] * werow_ref[...] + bias_ref[...]).astype(out_ref.dtype)


# --------------------------------------------------------------------------
# Trace-time algebraic fold of the whole module into table / row / bias
# --------------------------------------------------------------------------
def _fuse_params(params):
    f32 = jnp.float32
    table = params["emb_table"].astype(f32)                 # (1000, 32)
    wg_t = params["wg"].T.astype(f32)                       # (32, 32)  in x out
    bg = params["bg"].reshape(1, -1).astype(f32)            # (1, 32)
    we_t = params["we"].T.astype(f32)                       # (1, 8)
    be = params["be"].reshape(1, -1).astype(f32)            # (1, 8)
    wo_t = params["wo"].T.astype(f32)                       # (40, 32)
    woa_t = wo_t[:EMBEDDING_DIM, :]                         # (32, 32)
    woe_t = wo_t[EMBEDDING_DIM:, :]                         # (8, 32)
    bo = params["bo"].reshape(1, -1).astype(f32)            # (1, 32)
    # ((T[id] Wg^T + bg) Woa) + ((e We^T + be) Woe) + bo
    #   = T[id] (Wg^T Woa)  +  e * (We^T Woe)  +  (bg Woa + be Woe + bo)
    table_fused = table @ (wg_t @ woa_t)                    # (1000, 32)
    we_row = we_t @ woe_t                                   # (1, 32)
    bias_fused = bg @ woa_t + be @ woe_t + bo               # (1, 32)
    return table_fused, we_row, bias_fused


def adaptive_appearance_embedding(appearance_ids, exposure_values, params, *, tile_n=2048):
    """appearance_ids: (N,) int; exposure_values: (N, 1) f32 -> (N, 32) f32."""
    n = appearance_ids.shape[0]
    f32 = jnp.float32
    table_fused, we_row, bias_fused = _fuse_params(params)

    # Batch tiling: lane-chunk granularity; even #tiles so both v7x TCs are used.
    tile_n = max(LANE, _round_up(min(tile_n, _round_up(n, LANE)), LANE))
    num_tiles = _round_up(n, tile_n) // tile_n
    if num_tiles > 1 and num_tiles % 2:
        num_tiles += 1
    n_pad = num_tiles * tile_n

    # Lane-dense scalar inputs; padded rows read id 0 / exposure 0 and are
    # sliced off at the end (do NOT reduce over padded output rows).
    ids_row = jnp.zeros((1, n_pad), jnp.int32).at[0, :n].set(appearance_ids.astype(jnp.int32))
    expo_row = jnp.zeros((1, n_pad), f32).at[0, :n].set(exposure_values.astype(f32).reshape(n))

    out_shape = jax.ShapeDtypeStruct((n_pad, EMBEDDING_DIM), f32)
    out_spec = pl.BlockSpec((tile_n, EMBEDDING_DIM), lambda i: (i, 0))
    cparams = pltpu.CompilerParams(dimension_semantics=("parallel",))

    # Primary path operands: f32 table with bias folded in, (8, 32, 128) layout.
    # (Padded rows 1000..1023 stay zero and are never selected: ids are clamped.)
    table_fb = jnp.zeros((E_PAD, EMBEDDING_DIM), f32).at[:NUM_EMBEDDINGS].set(
        table_fused + bias_fused)
    tab3 = jnp.transpose(table_fb.reshape(NUM_GROUPS, LANE, EMBEDDING_DIM), (0, 2, 1))
    we_col = jnp.broadcast_to(we_row.reshape(EMBEDDING_DIM, 1), (EMBEDDING_DIM, LANE))

    cost = pl.CostEstimate(                    # memory-bound: no matmul flops
        flops=2 * n_pad * EMBEDDING_DIM,
        transcendentals=0,
        bytes_accessed=n_pad * (4 + 4 + 4 * EMBEDDING_DIM) + tab3.size * 4 + we_col.size * 4,
    )

    gather_call = pl.pallas_call(
        _gather_kernel,
        out_shape=out_shape,
        grid=(num_tiles,),
        in_specs=[
            pl.BlockSpec((1, tile_n), lambda i: (0, i)),                        # ids
            pl.BlockSpec((1, tile_n), lambda i: (0, i)),                        # exposure
            pl.BlockSpec((NUM_GROUPS, EMBEDDING_DIM, LANE), lambda i: (0, 0, 0)),  # table (VMEM-resident)
            pl.BlockSpec((EMBEDDING_DIM, LANE), lambda i: (0, 0)),              # exposure row (resident)
        ],
        out_specs=out_spec,
        compiler_params=cparams,
        cost_estimate=cost,
    )

    try:
        out = jax.block_until_ready(gather_call(ids_row, expo_row, tab3, we_col))
    except Exception:
        # TODO(synk): guarded fallback for Mosaic builds without the lane
        # dynamic-gather lowering — bf16 one-hot MXU lookup (bias kept in f32).
        tab_bf16 = jnp.zeros((E_PAD, EMBEDDING_DIM), f32).at[:NUM_EMBEDDINGS].set(
            table_fused).astype(jnp.bfloat16)
        onehot_call = pl.pallas_call(
            _onehot_kernel,
            out_shape=out_shape,
            grid=(num_tiles,),
            in_specs=[
                pl.BlockSpec((tile_n, 1), lambda i: (i, 0)),
                pl.BlockSpec((tile_n, 1), lambda i: (i, 0)),
                pl.BlockSpec((E_PAD, EMBEDDING_DIM), lambda i: (0, 0)),
                pl.BlockSpec((1, EMBEDDING_DIM), lambda i: (0, 0)),
                pl.BlockSpec((1, EMBEDDING_DIM), lambda i: (0, 0)),
            ],
            out_specs=out_spec,
            compiler_params=cparams,
        )
        out = jax.block_until_ready(onehot_call(
            ids_row.reshape(n_pad, 1), expo_row.reshape(n_pad, 1),
            tab_bf16, we_row, bias_fused))

    return out[:n]


# --------------------------------------------------------------------------
# Pure-JAX f32 reference (unfused) + parameter init
# --------------------------------------------------------------------------
def reference_forward(appearance_ids, exposure_values, params):
    ids = jnp.clip(appearance_ids, 0, NUM_EMBEDDINGS - 1)
    emb = params["emb_table"][ids]                                   # (N, 32)
    app = emb @ params["wg"].T + params["bg"]                        # (N, 32)
    exp_emb = exposure_values @ params["we"].T + params["be"]        # (N, 8)
    combined = jnp.concatenate([app, exp_emb], axis=-1)              # (N, 40)
    return combined @ params["wo"].T + params["bo"]                  # (N, 32)


def init_params(key):
    ks = jax.random.split(key, 7)
    total_dim = EMBEDDING_DIM + EXPOSURE_DIM   # 40
    return {
        # nn.Embedding weight, init normal(0, 0.1) per the module
        "emb_table": 0.1 * jax.random.normal(ks[0], (NUM_EMBEDDINGS, EMBEDDING_DIM), jnp.float32),
        # global_transform: Linear(32, 32) — torch layout (out, in)
        "wg": 0.1 * jax.random.normal(ks[1], (EMBEDDING_DIM, EMBEDDING_DIM), jnp.float32),
        "bg": 0.1 * jax.random.normal(ks[2], (EMBEDDING_DIM,), jnp.float32),
        # exposure transform: Linear(1, 8) (see dim-bug note at top)
        "we": 0.1 * jax.random.normal(ks[3], (EXPOSURE_DIM, 1), jnp.float32),
        "be": 0.1 * jax.random.normal(ks[4], (EXPOSURE_DIM,), jnp.float32),
        # output_projection: Linear(40, 32)
        "wo": 0.1 * jax.random.normal(ks[5], (EMBEDDING_DIM, total_dim), jnp.float32),
        "bo": 0.1 * jax.random.normal(ks[6], (EMBEDDING_DIM,), jnp.float32),
    }


if __name__ == "__main__":
    key = jax.random.PRNGKey(0)
    k_param, k_ids, k_expo = jax.random.split(key, 3)

    params = init_params(k_param)

    # Small demo shape; tile_n=128 exercises a multi-tile grid (300 -> 3 tiles,
    # evened to 4 for the v7x two-core split).  For production N, sweep
    # tile_n in 1024-4096 (per-tile VMEM stays under ~5 MiB).
    N = 300
    appearance_ids = jax.random.randint(k_ids, (N,), 0, NUM_EMBEDDINGS, dtype=jnp.int32)
    exposure_values = jax.random.uniform(k_expo, (N, 1), jnp.float32, -1.0, 1.0)

    out = adaptive_appearance_embedding(appearance_ids, exposure_values, params, tile_n=128)
    out = jax.block_until_ready(out)

    ref = reference_forward(appearance_ids, exposure_values, params)
    assert out.shape == (N, EMBEDDING_DIM)
    # Primary (f32 gather) path differs from the reference only by fused-matmul
    # reassociation (~1e-6); 1e-3 also covers the bf16 one-hot fallback path.
    assert jnp.allclose(out, ref, atol=1e-3, rtol=1e-3), "mismatch vs pure-JAX reference"

    print("KERNEL_OK")
</pallas_src>

<mosaic_0001>
module attributes {stable_mosaic.version = 11 : i64} {
  func.func @_onehot_kernel(%arg0: i32, %arg1: memref<128x1xi32, #tpu.memory_space<vmem>>, %arg2: memref<128x1xf32, #tpu.memory_space<vmem>>, %arg3: memref<1024x32xbf16, #tpu.memory_space<vmem>>, %arg4: memref<1x32xf32, #tpu.memory_space<vmem>>, %arg5: memref<1x32xf32, #tpu.memory_space<vmem>>, %arg6: memref<128x32xf32, #tpu.memory_space<vmem>>) attributes {dimension_semantics = [#tpu.dimension_semantics<parallel>], iteration_bounds = array<i64: 4>, scalar_prefetch = 0 : i64, scratch_operands = 0 : i64, tpu.core_type = #tpu.core_type<tc>, window_params = [{transform_indices = @transform_0, window_bounds = array<i64: 128, 1>}, {transform_indices = @transform_1, window_bounds = array<i64: 128, 1>}, {pipeline_mode = #tpu.pipeline_mode<synchronous>, transform_indices = @transform_2, window_bounds = array<i64: 1024, 32>}, {pipeline_mode = #tpu.pipeline_mode<synchronous>, transform_indices = @transform_3, window_bounds = array<i64: 1, 32>}, {pipeline_mode = #tpu.pipeline_mode<synchronous>, transform_indices = @transform_4, window_bounds = array<i64: 1, 32>}, {transform_indices = @transform_5, window_bounds = array<i64: 128, 32>}]} {
    %c0 = arith.constant 0 : index
    %c0_0 = arith.constant 0 : index
    %0 = vector.load %arg1[%c0, %c0_0] : memref<128x1xi32, #tpu.memory_space<vmem>>, vector<128x1xi32>
    %c0_i32 = arith.constant 0 : i32
    %c999_i32 = arith.constant 999 : i32
    %1 = vector.broadcast %c0_i32 : i32 to vector<128x1xi32>
    %2 = arith.maxsi %1, %0 : vector<128x1xi32>
    %3 = vector.broadcast %c999_i32 : i32 to vector<128x1xi32>
    %4 = arith.minsi %3, %2 : vector<128x1xi32>
    %5 = tpu.iota {dimensions = array<i32: 1>} : vector<128x1024xi32>
    %6 = vector.broadcast %4 : vector<128x1xi32> to vector<128x1024xi32>
    %7 = arith.cmpi eq, %5, %6 : vector<128x1024xi32>
    %8 = arith.extui %7 : vector<128x1024xi1> to vector<128x1024xi32>
    %9 = arith.sitofp %8 : vector<128x1024xi32> to vector<128x1024xf32>
    %10 = arith.truncf %9 : vector<128x1024xf32> to vector<128x1024xbf16>
    %c0_1 = arith.constant 0 : index
    %c0_2 = arith.constant 0 : index
    %11 = vector.load %arg3[%c0_1, %c0_2] : memref<1024x32xbf16, #tpu.memory_space<vmem>>, vector<1024x32xbf16>
    %cst = arith.constant dense<0.000000e+00> : vector<128x32xf32>
    %12 = tpu.matmul %10, %11, %cst {dimension_numbers = #tpu.dot_dimension_numbers<[1], [0], [0], [1], [0, 0, 1, 1], [], []>} : vector<128x1024xbf16>, vector<1024x32xbf16>, vector<128x32xf32> -> vector<128x32xf32>
    %c0_3 = arith.constant 0 : index
    %c0_4 = arith.constant 0 : index
    %13 = vector.load %arg2[%c0_3, %c0_4] : memref<128x1xf32, #tpu.memory_space<vmem>>, vector<128x1xf32>
    %c0_5 = arith.constant 0 : index
    %c0_6 = arith.constant 0 : index
    %14 = vector.load %arg4[%c0_5, %c0_6] : memref<1x32xf32, #tpu.memory_space<vmem>>, vector<1x32xf32>
    %15 = vector.broadcast %13 : vector<128x1xf32> to vector<128x32xf32>
    %16 = vector.broadcast %14 : vector<1x32xf32> to vector<128x32xf32>
    %17 = arith.mulf %15, %16 : vector<128x32xf32>
    %18 = arith.addf %12, %17 : vector<128x32xf32>
    %c0_7 = arith.constant 0 : index
    %c0_8 = arith.constant 0 : index
    %19 = vector.load %arg5[%c0_7, %c0_8] : memref<1x32xf32, #tpu.memory_space<vmem>>, vector<1x32xf32>
    %20 = vector.broadcast %19 : vector<1x32xf32> to vector<128x32xf32>
    %21 = arith.addf %18, %20 : vector<128x32xf32>
    %c0_9 = arith.constant 0 : index
    %c0_10 = arith.constant 0 : index
    %22 = vector.load %arg6[%c0_9, %c0_10] : memref<128x32xf32, #tpu.memory_space<vmem>>, vector<128x32xf32>
    tpu.vector_store %arg6[%c0_9, %c0_10], %21 {strides = array<i32>} : memref<128x32xf32, #tpu.memory_space<vmem>>, vector<128x32xf32>,
    return
  }
  func.func @transform_0(%arg0: i32) -> (i32, i32) {
    %c0_i32 = arith.constant 0 : i32
    %c0_i32_0 = arith.constant 0 : i32
    return %arg0, %c0_i32 : i32, i32
  }
  func.func @transform_1(%arg0: i32) -> (i32, i32) {
    %c0_i32 = arith.constant 0 : i32
    %c0_i32_0 = arith.constant 0 : i32
    return %arg0, %c0_i32 : i32, i32
  }
  func.func @transform_2(%arg0: i32) -> (i32, i32) {
    %c0_i32 = arith.constant 0 : i32
    %c0_i32_0 = arith.constant 0 : i32
    %c0_i32_1 = arith.constant 0 : i32
    return %c0_i32, %c0_i32_0 : i32, i32
  }
  func.func @transform_3(%arg0: i32) -> (i32, i32) {
    %c0_i32 = arith.constant 0 : i32
    %c0_i32_0 = arith.constant 0 : i32
    %c0_i32_1 = arith.constant 0 : i32
    return %c0_i32, %c0_i32_0 : i32, i32
  }
  func.func @transform_4(%arg0: i32) -> (i32, i32) {
    %c0_i32 = arith.constant 0 : i32
    %c0_i32_0 = arith.constant 0 : i32
    %c0_i32_1 = arith.constant 0 : i32
    return %c0_i32, %c0_i32_0 : i32, i32
  }
  func.func @transform_5(%arg0: i32) -> (i32, i32) {
    %c0_i32 = arith.constant 0 : i32
    %c0_i32_0 = arith.constant 0 : i32
    return %arg0, %c0_i32 : i32, i32
  }
}

</mosaic_0001>

<llo_original>
// kernel: tpu_custom_call.1
$region0: #{tpu_custom_call.1}
  #allocation0 [shape = 'u32[]', space=smem, size = 0x4, offset = 0x4, fixed_abs, tag = 'smem constant byte address 0x4 - core index']
  #allocation1 [shape = 'u32[144,128]{1,0:T(1,128)}', space=vmem, size = 0x12000, scoped, tag = 'internal scratch']
  %s0 = inlined_call_operand.vmem [shape: s32[512,1], index: 0, kind: input, shape index: {}]
  %s1 = inlined_call_operand.vmem [shape: f32[512,1], index: 1, kind: input, shape index: {}]
  %s2 = inlined_call_operand.vmem [shape: bf16[1024,32], index: 2, kind: input, shape index: {}]
  %s3 = inlined_call_operand.vmem [shape: f32[1,32], index: 3, kind: input, shape index: {}]
  %s4 = inlined_call_operand.vmem [shape: f32[1,32], index: 4, kind: input, shape index: {}]
  %s5 = inlined_call_operand.vmem [shape: f32[512,32], index: 5, kind: output, shape index: {}]
  %s6 = sld [smem:[#allocation0]]
  $region53: #{tpu_custom_call.1} parent=0
    _
  %s8 = ssub.s32 1, %s6
  %s9 = scalar_select 0, %s8, %s6
  loop: start=0, step=1, limit=6
  $region2: #{tpu_custom_call.1} parent=0 // loop_pre_header
    _
  $region3: #{tpu_custom_call.1} parent=0 // loop_header
    %s11 = sphi 0, %s15
    %p12 = scmp.ge.s32.totalorder %s11, 6
    %s21 = sphi 0, %s23
    %s24 = sphi 0, %s21
    %s25 = sphi 0, %s24
    %s41 = sphi 0, %s25
    %s47 = sphi 0, %s49
    %s50 = sphi 0, %s47
    %s51 = sphi 0, %s50
    %s67 = sphi 0, %s51
    %s71 = sphi 0, %s71
    %s73 = sphi 0, %s71
    %s74 = sphi 0, %s73
    %s88 = sphi 0, %s74
    %s92 = sphi 0, %s92
    %s94 = sphi 0, %s92
    %s95 = sphi 0, %s94
    %s109 = sphi 0, %s95
    %s113 = sphi 0, %s113
    %s115 = sphi 0, %s113
    %s116 = sphi 0, %s115
    %s130 = sphi 0, %s116
    %s136 = sphi 0, %s138
    %s139 = sphi 0, %s136
    %s140 = sphi 0, %s139
    %s156 = sphi 0, %s140
  $region4: #{tpu_custom_call.1} parent=0 // loop_header_branch
    %14 = sbr.rel (%p12) target = $region8
  $region5: #{tpu_custom_call.1} parent=0 // loop_body
    %s16 = ssub.s32 %s11, 1
    %s17 = ssub.s32 %s11, 2
    %s18 = sadd.s32 %s11, 1
    %s19 = ssub.s32 %s11, %s18
    %p20 = scmp.eq.s32.totalorder %s19, 0
    %s22 = sadd.s32 %s21, 1
    %s23 = scalar_select %p20, %s21, %s22
    %p26 = pneg %p20
    %p27 = scmp.eq.s32.totalorder %s11, 3
    %p28 = por %p26, %p27
    %p29 = scmp.ne.s32.totalorder %s21, %s24
    %p30 = scmp.eq.s32.totalorder %s11, 0
    %p31 = por %p29, %p30
    %p32 = scmp.ne.s32.totalorder %s21, %s24
    %p33 = scmp.eq.s32.totalorder %s16, 3
    %p34 = por %p32, %p33
    %p35 = scmp.ne.s32.totalorder %s24, %s25
    %p36 = scmp.eq.s32.totalorder %s16, 0
    %p37 = por %p35, %p36
    %p38 = scmp.ne.s32.totalorder %s24, %s25
    %p39 = scmp.eq.s32.totalorder %s17, 3
    %p40 = por %p38, %p39
    %p42 = scmp.ne.s32.totalorder %s25, %s41
    %p43 = scmp.eq.s32.totalorder %s17, 0
    %p44 = por %p42, %p43
    %s45 = ssub.s32 %s11, %s18
    %p46 = scmp.eq.s32.totalorder %s45, 0
    %s48 = sadd.s32 %s47, 1
    %s49 = scalar_select %p46, %s47, %s48
    %p52 = pneg %p46
    %p53 = scmp.eq.s32.totalorder %s11, 3
    %p54 = por %p52, %p53
    %p55 = scmp.ne.s32.totalorder %s47, %s50
    %p56 = scmp.eq.s32.totalorder %s11, 0
    %p57 = por %p55, %p56
    %p58 = scmp.ne.s32.totalorder %s47, %s50
    %p59 = scmp.eq.s32.totalorder %s16, 3
    %p60 = por %p58, %p59
    %p61 = scmp.ne.s32.totalorder %s50, %s51
    %p62 = scmp.eq.s32.totalorder %s16, 0
    %p63 = por %p61, %p62
    %p64 = scmp.ne.s32.totalorder %s50, %s51
    %p65 = scmp.eq.s32.totalorder %s17, 3
    %p66 = por %p64, %p65
    %p68 = scmp.ne.s32.totalorder %s51, %s67
    %p69 = scmp.eq.s32.totalorder %s17, 0
    %p70 = por %p68, %p69
    %s72 = sadd.s32 %s71, 1
    %p75 = scmp.eq.s32.totalorder %s11, 3
    %p76 = scmp.ne.s32.totalorder %s71, %s73
    %p77 = scmp.eq.s32.totalorder %s11, 0
    %p78 = por %p76, %p77
    %p79 = scmp.ne.s32.totalorder %s71, %s73
    %p80 = scmp.eq.s32.totalorder %s16, 3
    %p81 = por %p79, %p80
    %p82 = scmp.ne.s32.totalorder %s73, %s74
    %p83 = scmp.eq.s32.totalorder %s16, 0
    %p84 = por %p82, %p83
    %p85 = scmp.ne.s32.totalorder %s73, %s74
    %p86 = scmp.eq.s32.totalorder %s17, 3
    %p87 = por %p85, %p86
    %p89 = scmp.ne.s32.totalorder %s74, %s88
    %p90 = scmp.eq.s32.totalorder %s17, 0
    %p91 = por %p89, %p90
    %s93 = sadd.s32 %s92, 1
    %p96 = scmp.eq.s32.totalorder %s11, 3
    %p97 = scmp.ne.s32.totalorder %s92, %s94
    %p98 = scmp.eq.s32.totalorder %s11, 0
    %p99 = por %p97, %p98
    %p100 = scmp.ne.s32.totalorder %s92, %s94
    %p101 = scmp.eq.s32.totalorder %s16, 3
    %p102 = por %p100, %p101
    %p103 = scmp.ne.s32.totalorder %s94, %s95
    %p104 = scmp.eq.s32.totalorder %s16, 0
    %p105 = por %p103, %p104
    %p106 = scmp.ne.s32.totalorder %s94, %s95
    %p107 = scmp.eq.s32.totalorder %s17, 3
    %p108 = por %p106, %p107
    %p110 = scmp.ne.s32.totalorder %s95, %s109
    %p111 = scmp.eq.s32.totalorder %s17, 0
    %p112 = por %p110, %p111
    %s114 = sadd.s32 %s113, 1
    %p117 = scmp.eq.s32.totalorder %s11, 3
    %p118 = scmp.ne.s32.totalorder %s113, %s115
    %p119 = scmp.eq.s32.totalorder %s11, 0
    %p120 = por %p118, %p119
    %p121 = scmp.ne.s32.totalorder %s113, %s115
    %p122 = scmp.eq.s32.totalorder %s16, 3
    %p123 = por %p121, %p122
    %p124 = scmp.ne.s32.totalorder %s115, %s116
    %p125 = scmp.eq.s32.totalorder %s16, 0
    %p126 = por %p124, %p125
    %p127 = scmp.ne.s32.totalorder %s115, %s116
    %p128 = scmp.eq.s32.totalorder %s17, 3
    %p129 = por %p127, %p128
    %p131 = scmp.ne.s32.totalorder %s116, %s130
    %p132 = scmp.eq.s32.totalorder %s17, 0
    %p133 = por %p131, %p132
    %s134 = ssub.s32 %s11, %s18
    %p135 = scmp.eq.s32.totalorder %s134, 0
    %s137 = sadd.s32 %s136, 1
    %s138 = scalar_select %p135, %s136, %s137
    %p141 = pneg %p135
    %p142 = scmp.eq.s32.totalorder %s11, 3
    %p143 = por %p141, %p142
    %p144 = scmp.ne.s32.totalorder %s136, %s139
    %p145 = scmp.eq.s32.totalorder %s11, 0
    %p146 = por %p144, %p145
    %p147 = scmp.ne.s32.totalorder %s136, %s139
    %p148 = scmp.eq.s32.totalorder %s16, 3
    %p149 = por %p147, %p148
    %p150 = scmp.ne.s32.totalorder %s139, %s140
    %p151 = scmp.eq.s32.totalorder %s16, 0
    %p152 = por %p150, %p151
    %p153 = scmp.ne.s32.totalorder %s139, %s140
    %p154 = scmp.eq.s32.totalorder %s17, 3
    %p155 = por %p153, %p154
    %p157 = scmp.ne.s32.totalorder %s140, %s156
    %p158 = scmp.eq.s32.totalorder %s17, 0
    %p159 = por %p157, %p158
    %p160 = scmp.le.s32.totalorder 1, %s11
    %p161 = scmp.lt.s32.totalorder %s11, 5
    %p162 = pnand %p160, %p161
    %p163 = pneg %p162
    // Predicated region
    $region9: #{tpu_custom_call.1} parent=5 // pred_check
      _
    $region10: #{tpu_custom_call.1} parent=5 // pred_check_branch
      %165 = sbr.rel (%p162) target = $region12
    $region11: #{tpu_custom_call.1} parent=5 // pred_region
      %s166 = ssub.s32 %s11, 1
      // Predicated region
      $region13: #{tpu_custom_call.1} parent=11 // pred_check
        %p167 = pneg %p84
      $region14: #{tpu_custom_call.1} parent=11 // pred_check_branch
        %169 = sbr.rel (%p167) target = $region16
      $region15: #{tpu_custom_call.1} parent=11 // pred_region
        _
      $region16: #{tpu_custom_call.1} parent=11 // pred_fallthru
        _
      // Predicated region
      $region17: #{tpu_custom_call.1} parent=11 // pred_check
        %p170 = pneg %p105
      $region18: #{tpu_custom_call.1} parent=11 // pred_check_branch
        %172 = sbr.rel (%p170) target = $region20
      $region19: #{tpu_custom_call.1} parent=11 // pred_region
        _
      $region20: #{tpu_custom_call.1} parent=11 // pred_fallthru
        _
      // Predicated region
      $region21: #{tpu_custom_call.1} parent=11 // pred_check
        %p173 = pneg %p126
      $region22: #{tpu_custom_call.1} parent=11 // pred_check_branch
        %175 = sbr.rel (%p173) target = $region24
      $region23: #{tpu_custom_call.1} parent=11 // pred_region
        _
      $region24: #{tpu_custom_call.1} parent=11 // pred_fallthru
        _
    $region12: #{tpu_custom_call.1} parent=5 // pred_fallthru
      _
    %p176 = scmp.lt.s32.totalorder %s11, 4
    // Predicated region
    $region25: #{tpu_custom_call.1} parent=5 // pred_check
      %p177 = pneg %p176
    $region26: #{tpu_custom_call.1} parent=5 // pred_check_branch
      %179 = sbr.rel (%p177) target = $region28
    $region27: #{tpu_custom_call.1} parent=5 // pred_region
      // Predicated region
      $region29: #{tpu_custom_call.1} parent=27 // pred_check
        %p180 = pneg %p31
      $region30: #{tpu_custom_call.1} parent=27 // pred_check_branch
        %182 = sbr.rel (%p180) target = $region32
      $region31: #{tpu_custom_call.1} parent=27 // pred_region
        %s183 = smul.u32 16, %s11
        %p184 = scmp.lt.s32.totalorder %s183, 63
        %s185 = scalar_select %p184, %s183, 63
        %s186 = smul.addr %s185, 8
        %s187 = scalar_lea.vmem %s0, %s186
        %s188 = smul.u32 16, %s11
      $region32: #{tpu_custom_call.1} parent=27 // pred_fallthru
        _
      // Predicated region
      $region33: #{tpu_custom_call.1} parent=27 // pred_check
        %p189 = pneg %p57
      $region34: #{tpu_custom_call.1} parent=27 // pred_check_branch
        %191 = sbr.rel (%p189) target = $region36
      $region35: #{tpu_custom_call.1} parent=27 // pred_region
        %s192 = smul.u32 16, %s11
        %p193 = scmp.lt.s32.totalorder %s192, 63
        %s194 = scalar_select %p193, %s192, 63
        %s195 = smul.addr %s194, 8
        %s196 = scalar_lea.vmem %s1, %s195
        %s197 = smul.u32 16, %s11
      $region36: #{tpu_custom_call.1} parent=27 // pred_fallthru
        _
    $region28: #{tpu_custom_call.1} parent=5 // pred_fallthru
      _
    %p198 = scmp.le.s32.totalorder 1, %s11
    %p199 = scmp.lt.s32.totalorder %s11, 5
    %p200 = pnand %p198, %p199
    %p201 = pneg %p200
    // Predicated region
    $region37: #{tpu_custom_call.1} parent=5 // pred_check
      _
    $region38: #{tpu_custom_call.1} parent=5 // pred_check_branch
      %203 = sbr.rel (%p200) target = $region40
    $region39: #{tpu_custom_call.1} parent=5 // pred_region
      %s204 = ssub.s32 %s11, 1
      %s205 = smul.u32 16, %s16
      %p206 = scmp.lt.s32.totalorder %s205, 63
      %s207 = scalar_select %p206, %s205, 63
      %s208 = smul.addr %s207, 8
      %s209 = scalar_lea.vmem %s0, %s208
      %p210 = pneg %p37
      %p211 = pneg %p34
      %s212 = smul.u32 16, %s16
      %p213 = scmp.lt.s32.totalorder %s212, 63
      %s214 = scalar_select %p213, %s212, 63
      %s215 = smul.addr %s214, 8
      %s216 = scalar_lea.vmem %s1, %s215
      %p217 = pneg %p63
      %p218 = pneg %p60
      %p219 = pneg %p84
      %p220 = pneg %p81
      %p221 = pneg %p105
      %p222 = pneg %p102
      %p223 = pneg %p126
      %p224 = pneg %p123
      %p225 = pneg %p152
      %p226 = pneg %p149
      %s227 = smul.u32 16, %s16
      %p228 = scmp.lt.s32.totalorder %s227, 63
      %s229 = scalar_select %p228, %s227, 63
      %s230 = smul.addr %s229, 8
      %s231 = scalar_lea.vmem %s5, %s230
      %s232 = smul.u32 16, %s16
      %p233 = scmp.lt.s32.totalorder %s232, 63
      %s234 = scalar_select %p233, %s232, 63
      %s235 = smul.addr %s234, 8
      %s236 = scalar_lea.vmem %s0, %s235
      %s237 = smul.u32 16, %s16
      %s238 = smul.u32 16, %s16
      %p239 = scmp.lt.s32.totalorder %s238, 63
      %s240 = scalar_select %p239, %s238, 63
      %s241 = smul.addr %s240, 8
      %s242 = scalar_lea.vmem %s1, %s241
      %s243 = smul.u32 16, %s16
      %s244 = smul.u32 16, %s16
      %p245 = scmp.lt.s32.totalorder %s244, 63
      %s246 = scalar_select %p245, %s244, 63
      %s247 = smul.addr %s246, 8
      %s248 = scalar_lea.vmem %s5, %s247
      %s249 = smul.u32 16, %s16
      %v251 = vld [vmem:[%s236] sm:$0xff]
      %v252 = vld [vmem:[%s236 + $0x8] sm:$0xff]
      %v253 = vld [vmem:[%s236 + $0x10] sm:$0xff]
      %v254 = vld [vmem:[%s236 + $0x18] sm:$0xff]
      %v255 = vld [vmem:[%s236 + $0x20] sm:$0xff]
      %v256 = vld [vmem:[%s236 + $0x28] sm:$0xff]
      %v257 = vld [vmem:[%s236 + $0x30] sm:$0xff]
      %v258 = vld [vmem:[%s236 + $0x38] sm:$0xff]
      %v259 = vld [vmem:[%s236 + $0x40] sm:$0xff]
      %v260 = vld [vmem:[%s236 + $0x48] sm:$0xff]
      %v261 = vld [vmem:[%s236 + $0x50] sm:$0xff]
      %v262 = vld [vmem:[%s236 + $0x58] sm:$0xff]
      %v263 = vld [vmem:[%s236 + $0x60] sm:$0xff]
      %v264 = vld [vmem:[%s236 + $0x68] sm:$0xff]
      %v265 = vld [vmem:[%s236 + $0x70] sm:$0xff]
      %v266 = vld [vmem:[%s236 + $0x78] sm:$0xff]
      %vm267 = vcmp.gt.s32.totalorder %v251, 0
      %v268 = vsel %vm267, %v251, 0
      %vm269 = vcmp.gt.s32.totalorder %v252, 0
      %v270 = vsel %vm269, %v252, 0
      %vm271 = vcmp.gt.s32.totalorder %v253, 0
      %v272 = vsel %vm271, %v253, 0
      %vm273 = vcmp.gt.s32.totalorder %v254, 0
      %v274 = vsel %vm273, %v254, 0
      %vm275 = vcmp.gt.s32.totalorder %v255, 0
      %v276 = vsel %vm275, %v255, 0
      %vm277 = vcmp.gt.s32.totalorder %v256, 0
      %v278 = vsel %vm277, %v256, 0
      %vm279 = vcmp.gt.s32.totalorder %v257, 0
      %v280 = vsel %vm279, %v257, 0
      %vm281 = vcmp.gt.s32.totalorder %v258, 0
      %v282 = vsel %vm281, %v258, 0
      %vm283 = vcmp.gt.s32.totalorder %v259, 0
      %v284 = vsel %vm283, %v259, 0
      %vm285 = vcmp.gt.s32.totalorder %v260, 0
      %v286 = vsel %vm285, %v260, 0
      %vm287 = vcmp.gt.s32.totalorder %v261, 0
      %v288 = vsel %vm287, %v261, 0
      %vm289 = vcmp.gt.s32.totalorder %v262, 0
      %v290 = vsel %vm289, %v262, 0
      %vm291 = vcmp.gt.s32.totalorder %v263, 0
      %v292 = vsel %vm291, %v263, 0
      %vm293 = vcmp.gt.s32.totalorder %v264, 0
      %v294 = vsel %vm293, %v264, 0
      %vm295 = vcmp.gt.s32.totalorder %v265, 0
      %v296 = vsel %vm295, %v265, 0
      %vm297 = vcmp.gt.s32.totalorder %v266, 0
      %v298 = vsel %vm297, %v266, 0
      %vm299 = vcmp.lt.s32.totalorder %v268, 999
      %v300 = vsel %vm299, %v268, 999
      %vm301 = vcmp.lt.s32.totalorder %v270, 999
      %v302 = vsel %vm301, %v270, 999
      %vm303 = vcmp.lt.s32.totalorder %v272, 999
      %v304 = vsel %vm303, %v272, 999
      %vm305 = vcmp.lt.s32.totalorder %v274, 999
      %v306 = vsel %vm305, %v274, 999
      %vm307 = vcmp.lt.s32.totalorder %v276, 999
      %v308 = vsel %vm307, %v276, 999
      %vm309 = vcmp.lt.s32.totalorder %v278, 999
      %v310 = vsel %vm309, %v278, 999
      %vm311 = vcmp.lt.s32.totalorder %v280, 999
      %v312 = vsel %vm311, %v280, 999
      %vm313 = vcmp.lt.s32.totalorder %v282, 999
      %v314 = vsel %vm313, %v282, 999
      %vm315 = vcmp.lt.s32.totalorder %v284, 999
      %v316 = vsel %vm315, %v284, 999
      %vm317 = vcmp.lt.s32.totalorder %v286, 999
      %v318 = vsel %vm317, %v286, 999
      %vm319 = vcmp.lt.s32.totalorder %v288, 999
      %v320 = vsel %vm319, %v288, 999
      %vm321 = vcmp.lt.s32.totalorder %v290, 999
      %v322 = vsel %vm321, %v290, 999
      %vm323 = vcmp.lt.s32.totalorder %v292, 999
      %v324 = vsel %vm323, %v292, 999
      %vm325 = vcmp.lt.s32.totalorder %v294, 999
      %v326 = vsel %vm325, %v294, 999
      %vm327 = vcmp.lt.s32.totalorder %v296, 999
      %v328 = vsel %vm327, %v296, 999
      %vm329 = vcmp.lt.s32.totalorder %v298, 999
      %v330 = vsel %vm329, %v298, 999
      %v331 = vlaneseq
      %v332 = vand.u32 %v331, 127
      %v333 = vadd.s32 %v332, 128
      %v334 = vadd.s32 %v332, 256
      %v335 = vadd.s32 %v332, 384
      %v336 = vadd.s32 %v332, 512
      %v337 = vadd.s32 %v332, 640
      %v338 = vadd.s32 %v332, 768
      %v339 = vadd.s32 %v332, 896
      %340 = vset.pattern.permute.xlu0 0
      %341 = vperm.xlu0 %340, %v300
      %v342 = vpop.permute.xlu0 %341
      %343 = vset.pattern.permute.xlu0 0
      %344 = vperm.xlu0 %343, %v302
      %v345 = vpop.permute.xlu0 %344
      %346 = vset.pattern.permute.xlu0 0
      %347 = vperm.xlu0 %346, %v304
      %v348 = vpop.permute.xlu0 %347
      %349 = vset.pattern.permute.xlu0 0
      %350 = vperm.xlu0 %349, %v306
      %v351 = vpop.permute.xlu0 %350
      %352 = vset.pattern.permute.xlu0 0
      %353 = vperm.xlu0 %352, %v308
      %v354 = vpop.permute.xlu0 %353
      %355 = vset.pattern.permute.xlu0 0
      %356 = vperm.xlu0 %355, %v310
      %v357 = vpop.permute.xlu0 %356
      %358 = vset.pattern.permute.xlu0 0
      %359 = vperm.xlu0 %358, %v312
      %v360 = vpop.permute.xlu0 %359
      %361 = vset.pattern.permute.xlu0 0
      %362 = vperm.xlu0 %361, %v314
      %v363 = vpop.permute.xlu0 %362
      %364 = vset.pattern.permute.xlu0 0
      %365 = vperm.xlu0 %364, %v316
      %v366 = vpop.permute.xlu0 %365
      %367 = vset.pattern.permute.xlu0 0
      %368 = vperm.xlu0 %367, %v318
      %v369 = vpop.permute.xlu0 %368
      %370 = vset.pattern.permute.xlu0 0
      %371 = vperm.xlu0 %370, %v320
      %v372 = vpop.permute.xlu0 %371
      %373 = vset.pattern.permute.xlu0 0
      %374 = vperm.xlu0 %373, %v322
      %v375 = vpop.permute.xlu0 %374
      %376 = vset.pattern.permute.xlu0 0
      %377 = vperm.xlu0 %376, %v324
      %v378 = vpop.permute.xlu0 %377
      %379 = vset.pattern.permute.xlu0 0
      %380 = vperm.xlu0 %379, %v326
      %v381 = vpop.permute.xlu0 %380
      %382 = vset.pattern.permute.xlu0 0
      %383 = vperm.xlu0 %382, %v328
      %v384 = vpop.permute.xlu0 %383
      %385 = vset.pattern.permute.xlu0 0
      %386 = vperm.xlu0 %385, %v330
      %v387 = vpop.permute.xlu0 %386
      %vm388 = vcmp.eq.s32.totalorder %v332, %v342
      %vm389 = vcmp.eq.s32.totalorder %v333, %v342
      %vm390 = vcmp.eq.s32.totalorder %v334, %v342
      %vm391 = vcmp.eq.s32.totalorder %v335, %v342
      %vm392 = vcmp.eq.s32.totalorder %v336, %v342
      %vm393 = vcmp.eq.s32.totalorder %v337, %v342
      %vm394 = vcmp.eq.s32.totalorder %v338, %v342
      %vm395 = vcmp.eq.s32.totalorder %v339, %v342
      %vm396 = vcmp.eq.s32.totalorder %v332, %v345
      %vm397 = vcmp.eq.s32.totalorder %v333, %v345
      %vm398 = vcmp.eq.s32.totalorder %v334, %v345
      %vm399 = vcmp.eq.s32.totalorder %v335, %v345
      %vm400 = vcmp.eq.s32.totalorder %v336, %v345
      %vm401 = vcmp.eq.s32.totalorder %v337, %v345
      %vm402 = vcmp.eq.s32.totalorder %v338, %v345
      %vm403 = vcmp.eq.s32.totalorder %v339, %v345
      %vm404 = vcmp.eq.s32.totalorder %v332, %v348
      %vm405 = vcmp.eq.s32.totalorder %v333, %v348
      %vm406 = vcmp.eq.s32.totalorder %v334, %v348
      %vm407 = vcmp.eq.s32.totalorder %v335, %v348
      %vm408 = vcmp.eq.s32.totalorder %v336, %v348
      %vm409 = vcmp.eq.s32.totalorder %v337, %v348
      %vm410 = vcmp.eq.s32.totalorder %v338, %v348
      %vm411 = vcmp.eq.s32.totalorder %v339, %v348
      %vm412 = vcmp.eq.s32.totalorder %v332, %v351
      %vm413 = vcmp.eq.s32.totalorder %v333, %v351
      %vm414 = vcmp.eq.s32.totalorder %v334, %v351
      %vm415 = vcmp.eq.s32.totalorder %v335, %v351
      %vm416 = vcmp.eq.s32.totalorder %v336, %v351
      %vm417 = vcmp.eq.s32.totalorder %v337, %v351
      %vm418 = vcmp.eq.s32.totalorder %v338, %v351
      %vm419 = vcmp.eq.s32.totalorder %v339, %v351
      %vm420 = vcmp.eq.s32.totalorder %v332, %v354
      %vm421 = vcmp.eq.s32.totalorder %v333, %v354
      %vm422 = vcmp.eq.s32.totalorder %v334, %v354
      %vm423 = vcmp.eq.s32.totalorder %v335, %v354
      %vm424 = vcmp.eq.s32.totalorder %v336, %v354
      %vm425 = vcmp.eq.s32.totalorder %v337, %v354
      %vm426 = vcmp.eq.s32.totalorder %v338, %v354
      %vm427 = vcmp.eq.s32.totalorder %v339, %v354
      %vm428 = vcmp.eq.s32.totalorder %v332, %v357
      %vm429 = vcmp.eq.s32.totalorder %v333, %v357
      %vm430 = vcmp.eq.s32.totalorder %v334, %v357
      %vm431 = vcmp.eq.s32.totalorder %v335, %v357
      %vm432 = vcmp.eq.s32.totalorder %v336, %v357
      %vm433 = vcmp.eq.s32.totalorder %v337, %v357
      %vm434 = vcmp.eq.s32.totalorder %v338, %v357
      %vm435 = vcmp.eq.s32.totalorder %v339, %v357
      %vm436 = vcmp.eq.s32.totalorder %v332, %v360
      %vm437 = vcmp.eq.s32.totalorder %v333, %v360
      %vm438 = vcmp.eq.s32.totalorder %v334, %v360
      %vm439 = vcmp.eq.s32.totalorder %v335, %v360
      %vm440 = vcmp.eq.s32.totalorder %v336, %v360
      %vm441 = vcmp.eq.s32.totalorder %v337, %v360
      %vm442 = vcmp.eq.s32.totalorder %v338, %v360
      %vm443 = vcmp.eq.s32.totalorder %v339, %v360
      %vm444 = vcmp.eq.s32.totalorder %v332, %v363
      %vm445 = vcmp.eq.s32.totalorder %v333, %v363
      %vm446 = vcmp.eq.s32.totalorder %v334, %v363
      %vm447 = vcmp.eq.s32.totalorder %v335, %v363
      %vm448 = vcmp.eq.s32.totalorder %v336, %v363
      %vm449 = vcmp.eq.s32.totalorder %v337, %v363
      %vm450 = vcmp.eq.s32.totalorder %v338, %v363
      %vm451 = vcmp.eq.s32.totalorder %v339, %v363
      %vm452 = vcmp.eq.s32.totalorder %v332, %v366
      %vm453 = vcmp.eq.s32.totalorder %v333, %v366
      %vm454 = vcmp.eq.s32.totalorder %v334, %v366
      %vm455 = vcmp.eq.s32.totalorder %v335, %v366
      %vm456 = vcmp.eq.s32.totalorder %v336, %v366
      %vm457 = vcmp.eq.s32.totalorder %v337, %v366
      %vm458 = vcmp.eq.s32.totalorder %v338, %v366
      %vm459 = vcmp.eq.s32.totalorder %v339, %v366
      %vm460 = vcmp.eq.s32.totalorder %v332, %v369
      %vm461 = vcmp.eq.s32.totalorder %v333, %v369
      %vm462 = vcmp.eq.s32.totalorder %v334, %v369
      %vm463 = vcmp.eq.s32.totalorder %v335, %v369
      %vm464 = vcmp.eq.s32.totalorder %v336, %v369
      %vm465 = vcmp.eq.s32.totalorder %v337, %v369
      %vm466 = vcmp.eq.s32.totalorder %v338, %v369
      %vm467 = vcmp.eq.s32.totalorder %v339, %v369
      %vm468 = vcmp.eq.s32.totalorder %v332, %v372
      %vm469 = vcmp.eq.s32.totalorder %v333, %v372
      %vm470 = vcmp.eq.s32.totalorder %v334, %v372
      %vm471 = vcmp.eq.s32.totalorder %v335, %v372
      %vm472 = vcmp.eq.s32.totalorder %v336, %v372
      %vm473 = vcmp.eq.s32.totalorder %v337, %v372
      %vm474 = vcmp.eq.s32.totalorder %v338, %v372
      %vm475 = vcmp.eq.s32.totalorder %v339, %v372
      %vm476 = vcmp.eq.s32.totalorder %v332, %v375
      %vm477 = vcmp.eq.s32.totalorder %v333, %v375
      %vm478 = vcmp.eq.s32.totalorder %v334, %v375
      %vm479 = vcmp.eq.s32.totalorder %v335, %v375
      %vm480 = vcmp.eq.s32.totalorder %v336, %v375
      %vm481 = vcmp.eq.s32.totalorder %v337, %v375
      %vm482 = vcmp.eq.s32.totalorder %v338, %v375
      %vm483 = vcmp.eq.s32.totalorder %v339, %v375
      %vm484 = vcmp.eq.s32.totalorder %v332, %v378
      %vm485 = vcmp.eq.s32.totalorder %v333, %v378
      %vm486 = vcmp.eq.s32.totalorder %v334, %v378
      %vm487 = vcmp.eq.s32.totalorder %v335, %v378
      %vm488 = vcmp.eq.s32.totalorder %v336, %v378
      %vm489 = vcmp.eq.s32.totalorder %v337, %v378
      %vm490 = vcmp.eq.s32.totalorder %v338, %v378
      %vm491 = vcmp.eq.s32.totalorder %v339, %v378
      %vm492 = vcmp.eq.s32.totalorder %v332, %v381
      %vm493 = vcmp.eq.s32.totalorder %v333, %v381
      %vm494 = vcmp.eq.s32.totalorder %v334, %v381
      %vm495 = vcmp.eq.s32.totalorder %v335, %v381
      %vm496 = vcmp.eq.s32.totalorder %v336, %v381
      %vm497 = vcmp.eq.s32.totalorder %v337, %v381
      %vm498 = vcmp.eq.s32.totalorder %v338, %v381
      %vm499 = vcmp.eq.s32.totalorder %v339, %v381
      %vm500 = vcmp.eq.s32.totalorder %v332, %v384
      %vm501 = vcmp.eq.s32.totalorder %v333, %v384
      %vm502 = vcmp.eq.s32.totalorder %v334, %v384
      %vm503 = vcmp.eq.s32.totalorder %v335, %v384
      %vm504 = vcmp.eq.s32.totalorder %v336, %v384
      %vm505 = vcmp.eq.s32.totalorder %v337, %v384
      %vm506 = vcmp.eq.s32.totalorder %v338, %v384
      %vm507 = vcmp.eq.s32.totalorder %v339, %v384
      %vm508 = vcmp.eq.s32.totalorder %v332, %v387
      %vm509 = vcmp.eq.s32.totalorder %v333, %v387
      %vm510 = vcmp.eq.s32.totalorder %v334, %v387
      %vm511 = vcmp.eq.s32.totalorder %v335, %v387
      %vm512 = vcmp.eq.s32.totalorder %v336, %v387
      %vm513 = vcmp.eq.s32.totalorder %v337, %v387
      %vm514 = vcmp.eq.s32.totalorder %v338, %v387
      %vm515 = vcmp.eq.s32.totalorder %v339, %v387
      %v516 = vsel %vm388, 1, 0
      %v517 = vsel %vm389, 1, 0
      %v518 = vsel %vm390, 1, 0
      %v519 = vsel %vm391, 1, 0
      %v520 = vsel %vm392, 1, 0
      %v521 = vsel %vm393, 1, 0
      %v522 = vsel %vm394, 1, 0
      %v523 = vsel %vm395, 1, 0
      %v524 = vsel %vm396, 1, 0
      %v525 = vsel %vm397, 1, 0
      %v526 = vsel %vm398, 1, 0
      %v527 = vsel %vm399, 1, 0
      %v528 = vsel %vm400, 1, 0
      %v529 = vsel %vm401, 1, 0
      %v530 = vsel %vm402, 1, 0
      %v531 = vsel %vm403, 1, 0
      %v532 = vsel %vm404, 1, 0
      %v533 = vsel %vm405, 1, 0
      %v534 = vsel %vm406, 1, 0
      %v535 = vsel %vm407, 1, 0
      %v536 = vsel %vm408, 1, 0
      %v537 = vsel %vm409, 1, 0
      %v538 = vsel %vm410, 1, 0
      %v539 = vsel %vm411, 1, 0
      %v540 = vsel %vm412, 1, 0
      %v541 = vsel %vm413, 1, 0
      %v542 = vsel %vm414, 1, 0
      %v543 = vsel %vm415, 1, 0
      %v544 = vsel %vm416, 1, 0
      %v545 = vsel %vm417, 1, 0
      %v546 = vsel %vm418, 1, 0
      %v547 = vsel %vm419, 1, 0
      %v548 = vsel %vm420, 1, 0
      %v549 = vsel %vm421, 1, 0
      %v550 = vsel %vm422, 1, 0
      %v551 = vsel %vm423, 1, 0
      %v552 = vsel %vm424, 1, 0
      %v553 = vsel %vm425, 1, 0
      %v554 = vsel %vm426, 1, 0
      %v555 = vsel %vm427, 1, 0
      %v556 = vsel %vm428, 1, 0
      %v557 = vsel %vm429, 1, 0
      %v558 = vsel %vm430, 1, 0
      %v559 = vsel %vm431, 1, 0
      %v560 = vsel %vm432, 1, 0
      %v561 = vsel %vm433, 1, 0
      %v562 = vsel %vm434, 1, 0
      %v563 = vsel %vm435, 1, 0
      %v564 = vsel %vm436, 1, 0
      %v565 = vsel %vm437, 1, 0
      %v566 = vsel %vm438, 1, 0
      %v567 = vsel %vm439, 1, 0
      %v568 = vsel %vm440, 1, 0
      %v569 = vsel %vm441, 1, 0
      %v570 = vsel %vm442, 1, 0
      %v571 = vsel %vm443, 1, 0
      %v572 = vsel %vm444, 1, 0
      %v573 = vsel %vm445, 1, 0
      %v574 = vsel %vm446, 1, 0
      %v575 = vsel %vm447, 1, 0
      %v576 = vsel %vm448, 1, 0
      %v577 = vsel %vm449, 1, 0
      %v578 = vsel %vm450, 1, 0
      %v579 = vsel %vm451, 1, 0
      %v580 = vsel %vm452, 1, 0
      %v581 = vsel %vm453, 1, 0
      %v582 = vsel %vm454, 1, 0
      %v583 = vsel %vm455, 1, 0
      %v584 = vsel %vm456, 1, 0
      %v585 = vsel %vm457, 1, 0
      %v586 = vsel %vm458, 1, 0
      %v587 = vsel %vm459, 1, 0
      %v588 = vsel %vm460, 1, 0
      %v589 = vsel %vm461, 1, 0
      %v590 = vsel %vm462, 1, 0
      %v591 = vsel %vm463, 1, 0
      %v592 = vsel %vm464, 1, 0
      %v593 = vsel %vm465, 1, 0
      %v594 = vsel %vm466, 1, 0
      %v595 = vsel %vm467, 1, 0
      %v596 = vsel %vm468, 1, 0
      %v597 = vsel %vm469, 1, 0
      %v598 = vsel %vm470, 1, 0
      %v599 = vsel %vm471, 1, 0
      %v600 = vsel %vm472, 1, 0
      %v601 = vsel %vm473, 1, 0
      %v602 = vsel %vm474, 1, 0
      %v603 = vsel %vm475, 1, 0
      %v604 = vsel %vm476, 1, 0
      %v605 = vsel %vm477, 1, 0
      %v606 = vsel %vm478, 1, 0
      %v607 = vsel %vm479, 1, 0
      %v608 = vsel %vm480, 1, 0
      %v609 = vsel %vm481, 1, 0
      %v610 = vsel %vm482, 1, 0
      %v611 = vsel %vm483, 1, 0
      %v612 = vsel %vm484, 1, 0
      %v613 = vsel %vm485, 1, 0
      %v614 = vsel %vm486, 1, 0
      %v615 = vsel %vm487, 1, 0
      %v616 = vsel %vm488, 1, 0
      %v617 = vsel %vm489, 1, 0
      %v618 = vsel %vm490, 1, 0
      %v619 = vsel %vm491, 1, 0
      %v620 = vsel %vm492, 1, 0
      %v621 = vsel %vm493, 1, 0
      %v622 = vsel %vm494, 1, 0
      %v623 = vsel %vm495, 1, 0
      %v624 = vsel %vm496, 1, 0
      %v625 = vsel %vm497, 1, 0
      %v626 = vsel %vm498, 1, 0
      %v627 = vsel %vm499, 1, 0
      %v628 = vsel %vm500, 1, 0
      %v629 = vsel %vm501, 1, 0
      %v630 = vsel %vm502, 1, 0
      %v631 = vsel %vm503, 1, 0
      %v632 = vsel %vm504, 1, 0
      %v633 = vsel %vm505, 1, 0
      %v634 = vsel %vm506, 1, 0
      %v635 = vsel %vm507, 1, 0
      %v636 = vsel %vm508, 1, 0
      %v637 = vsel %vm509, 1, 0
      %v638 = vsel %vm510, 1, 0
      %v639 = vsel %vm511, 1, 0
      %v640 = vsel %vm512, 1, 0
      %v641 = vsel %vm513, 1, 0
      %v642 = vsel %vm514, 1, 0
      %v643 = vsel %vm515, 1, 0
      %v644 = vcvt.s32.f32 %v516
      %v645 = vcvt.s32.f32 %v517
      %v646 = vcvt.s32.f32 %v518
      %v647 = vcvt.s32.f32 %v519
      %v648 = vcvt.s32.f32 %v520
      %v649 = vcvt.s32.f32 %v521
      %v650 = vcvt.s32.f32 %v522
      %v651 = vcvt.s32.f32 %v523
      %v652 = vcvt.s32.f32 %v524
      %v653 = vcvt.s32.f32 %v525
      %v654 = vcvt.s32.f32 %v526
      %v655 = vcvt.s32.f32 %v527
      %v656 = vcvt.s32.f32 %v528
      %v657 = vcvt.s32.f32 %v529
      %v658 = vcvt.s32.f32 %v530
      %v659 = vcvt.s32.f32 %v531
      %v660 = vcvt.s32.f32 %v532
      %v661 = vcvt.s32.f32 %v533
      %v662 = vcvt.s32.f32 %v534
      %v663 = vcvt.s32.f32 %v535
      %v664 = vcvt.s32.f32 %v536
      %v665 = vcvt.s32.f32 %v537
      %v666 = vcvt.s32.f32 %v538
      %v667 = vcvt.s32.f32 %v539
      %v668 = vcvt.s32.f32 %v540
      %v669 = vcvt.s32.f32 %v541
      %v670 = vcvt.s32.f32 %v542
      %v671 = vcvt.s32.f32 %v543
      %v672 = vcvt.s32.f32 %v544
      %v673 = vcvt.s32.f32 %v545
      %v674 = vcvt.s32.f32 %v546
      %v675 = vcvt.s32.f32 %v547
      %v676 = vcvt.s32.f32 %v548
      %v677 = vcvt.s32.f32 %v549
      %v678 = vcvt.s32.f32 %v550
      %v679 = vcvt.s32.f32 %v551
      %v680 = vcvt.s32.f32 %v552
      %v681 = vcvt.s32.f32 %v553
      %v682 = vcvt.s32.f32 %v554
      %v683 = vcvt.s32.f32 %v555
      %v684 = vcvt.s32.f32 %v556
      %v685 = vcvt.s32.f32 %v557
      %v686 = vcvt.s32.f32 %v558
      %v687 = vcvt.s32.f32 %v559
      %v688 = vcvt.s32.f32 %v560
      %v689 = vcvt.s32.f32 %v561
      %v690 = vcvt.s32.f32 %v562
      %v691 = vcvt.s32.f32 %v563
      %v692 = vcvt.s32.f32 %v564
      %v693 = vcvt.s32.f32 %v565
      %v694 = vcvt.s32.f32 %v566
      %v695 = vcvt.s32.f32 %v567
      %v696 = vcvt.s32.f32 %v568
      %v697 = vcvt.s32.f32 %v569
      %v698 = vcvt.s32.f32 %v570
      %v699 = vcvt.s32.f32 %v571
      %v700 = vcvt.s32.f32 %v572
      %v701 = vcvt.s32.f32 %v573
      %v702 = vcvt.s32.f32 %v574
      %v703 = vcvt.s32.f32 %v575
      %v704 = vcvt.s32.f32 %v576
      %v705 = vcvt.s32.f32 %v577
      %v706 = vcvt.s32.f32 %v578
      %v707 = vcvt.s32.f32 %v579
      %v708 = vcvt.s32.f32 %v580
      %v709 = vcvt.s32.f32 %v581
      %v710 = vcvt.s32.f32 %v582
      %v711 = vcvt.s32.f32 %v583
      %v712 = vcvt.s32.f32 %v584
      %v713 = vcvt.s32.f32 %v585
      %v714 = vcvt.s32.f32 %v586
      %v715 = vcvt.s32.f32 %v587
      %v716 = vcvt.s32.f32 %v588
      %v717 = vcvt.s32.f32 %v589
      %v718 = vcvt.s32.f32 %v590
      %v719 = vcvt.s32.f32 %v591
      %v720 = vcvt.s32.f32 %v592
      %v721 = vcvt.s32.f32 %v593
      %v722 = vcvt.s32.f32 %v594
      %v723 = vcvt.s32.f32 %v595
      %v724 = vcvt.s32.f32 %v596
      %v725 = vcvt.s32.f32 %v597
      %v726 = vcvt.s32.f32 %v598
      %v727 = vcvt.s32.f32 %v599
      %v728 = vcvt.s32.f32 %v600
      %v729 = vcvt.s32.f32 %v601
      %v730 = vcvt.s32.f32 %v602
      %v731 = vcvt.s32.f32 %v603
      %v732 = vcvt.s32.f32 %v604
      %v733 = vcvt.s32.f32 %v605
      %v734 = vcvt.s32.f32 %v606
      %v735 = vcvt.s32.f32 %v607
      %v736 = vcvt.s32.f32 %v608
      %v737 = vcvt.s32.f32 %v609
      %v738 = vcvt.s32.f32 %v610
      %v739 = vcvt.s32.f32 %v611
      %v740 = vcvt.s32.f32 %v612
      %v741 = vcvt.s32.f32 %v613
      %v742 = vcvt.s32.f32 %v614
      %v743 = vcvt.s32.f32 %v615
      %v744 = vcvt.s32.f32 %v616
      %v745 = vcvt.s32.f32 %v617
      %v746 = vcvt.s32.f32 %v618
      %v747 = vcvt.s32.f32 %v619
      %v748 = vcvt.s32.f32 %v620
      %v749 = vcvt.s32.f32 %v621
      %v750 = vcvt.s32.f32 %v622
      %v751 = vcvt.s32.f32 %v623
      %v752 = vcvt.s32.f32 %v624
      %v753 = vcvt.s32.f32 %v625
      %v754 = vcvt.s32.f32 %v626
      %v755 = vcvt.s32.f32 %v627
      %v756 = vcvt.s32.f32 %v628
      %v757 = vcvt.s32.f32 %v629
      %v758 = vcvt.s32.f32 %v630
      %v759 = vcvt.s32.f32 %v631
      %v760 = vcvt.s32.f32 %v632
      %v761 = vcvt.s32.f32 %v633
      %v762 = vcvt.s32.f32 %v634
      %v763 = vcvt.s32.f32 %v635
      %v764 = vcvt.s32.f32 %v636
      %v765 = vcvt.s32.f32 %v637
      %v766 = vcvt.s32.f32 %v638
      %v767 = vcvt.s32.f32 %v639
      %v768 = vcvt.s32.f32 %v640
      %v769 = vcvt.s32.f32 %v641
      %v770 = vcvt.s32.f32 %v642
      %v771 = vcvt.s32.f32 %v643
      %v772 = vpack.c.bf16 %v652, %v644
      %v773 = vpack.c.bf16 %v653, %v645
      %v774 = vpack.c.bf16 %v654, %v646
      %v775 = vpack.c.bf16 %v655, %v647
      %v776 = vpack.c.bf16 %v656, %v648
      %v777 = vpack.c.bf16 %v657, %v649
      %v778 = vpack.c.bf16 %v658, %v650
      %v779 = vpack.c.bf16 %v659, %v651
      %v780 = vpack.c.bf16 %v668, %v660
      %v781 = vpack.c.bf16 %v669, %v661
      %v782 = vpack.c.bf16 %v670, %v662
      %v783 = vpack.c.bf16 %v671, %v663
      %v784 = vpack.c.bf16 %v672, %v664
      %v785 = vpack.c.bf16 %v673, %v665
      %v786 = vpack.c.bf16 %v674, %v666
      %v787 = vpack.c.bf16 %v675, %v667
      %v788 = vpack.c.bf16 %v684, %v676
      %v789 = vpack.c.bf16 %v685, %v677
      %v790 = vpack.c.bf16 %v686, %v678
      %v791 = vpack.c.bf16 %v687, %v679
      %v792 = vpack.c.bf16 %v688, %v680
      %v793 = vpack.c.bf16 %v689, %v681
      %v794 = vpack.c.bf16 %v690, %v682
      %v795 = vpack.c.bf16 %v691, %v683
      %v796 = vpack.c.bf16 %v700, %v692
      %v797 = vpack.c.bf16 %v701, %v693
      %v798 = vpack.c.bf16 %v702, %v694
      %v799 = vpack.c.bf16 %v703, %v695
      %v800 = vpack.c.bf16 %v704, %v696
      %v801 = vpack.c.bf16 %v705, %v697
      %v802 = vpack.c.bf16 %v706, %v698
      %v803 = vpack.c.bf16 %v707, %v699
      %v804 = vpack.c.bf16 %v716, %v708
      %v805 = vpack.c.bf16 %v717, %v709
      %v806 = vpack.c.bf16 %v718, %v710
      %v807 = vpack.c.bf16 %v719, %v711
      %v808 = vpack.c.bf16 %v720, %v712
      %v809 = vpack.c.bf16 %v721, %v713
      %v810 = vpack.c.bf16 %v722, %v714
      %v811 = vpack.c.bf16 %v723, %v715
      %v812 = vpack.c.bf16 %v732, %v724
      %v813 = vpack.c.bf16 %v733, %v725
      %v814 = vpack.c.bf16 %v734, %v726
      %v815 = vpack.c.bf16 %v735, %v727
      %v816 = vpack.c.bf16 %v736, %v728
      %v817 = vpack.c.bf16 %v737, %v729
      %v818 = vpack.c.bf16 %v738, %v730
      %v819 = vpack.c.bf16 %v739, %v731
      %v820 = vpack.c.bf16 %v748, %v740
      %v821 = vpack.c.bf16 %v749, %v741
      %v822 = vpack.c.bf16 %v750, %v742
      %v823 = vpack.c.bf16 %v751, %v743
      %v824 = vpack.c.bf16 %v752, %v744
      %v825 = vpack.c.bf16 %v753, %v745
      %v826 = vpack.c.bf16 %v754, %v746
      %v827 = vpack.c.bf16 %v755, %v747
      %v828 = vpack.c.bf16 %v764, %v756
      %v829 = vpack.c.bf16 %v765, %v757
      %v830 = vpack.c.bf16 %v766, %v758
      %v831 = vpack.c.bf16 %v767, %v759
      %v832 = vpack.c.bf16 %v768, %v760
      %v833 = vpack.c.bf16 %v769, %v761
      %v834 = vpack.c.bf16 %v770, %v762
      %v835 = vpack.c.bf16 %v771, %v763
      %v836 = vld [vmem:[%s2] sm:$0xf]
      %v837 = vld [vmem:[%s2 + $0x4] sm:$0xf]
      %v838 = vld [vmem:[%s2 + $0x8] sm:$0xf]
      %v839 = vld [vmem:[%s2 + $0xc] sm:$0xf]
      %v840 = vld [vmem:[%s2 + $0x10] sm:$0xf]
      %v841 = vld [vmem:[%s2 + $0x14] sm:$0xf]
      %v842 = vld [vmem:[%s2 + $0x18] sm:$0xf]
      %v843 = vld [vmem:[%s2 + $0x1c] sm:$0xf]
      %v844 = vld [vmem:[%s2 + $0x20] sm:$0xf]
      %v845 = vld [vmem:[%s2 + $0x24] sm:$0xf]
      %v846 = vld [vmem:[%s2 + $0x28] sm:$0xf]
      %v847 = vld [vmem:[%s2 + $0x2c] sm:$0xf]
      %v848 = vld [vmem:[%s2 + $0x30] sm:$0xf]
      %v849 = vld [vmem:[%s2 + $0x34] sm:$0xf]
      %v850 = vld [vmem:[%s2 + $0x38] sm:$0xf]
      %v851 = vld [vmem:[%s2 + $0x3c] sm:$0xf]
      %v852 = vld [vmem:[%s2 + $0x40] sm:$0xf]
      %v853 = vld [vmem:[%s2 + $0x44] sm:$0xf]
      %v854 = vld [vmem:[%s2 + $0x48] sm:$0xf]
      %v855 = vld [vmem:[%s2 + $0x4c] sm:$0xf]
      %v856 = vld [vmem:[%s2 + $0x50] sm:$0xf]
      %v857 = vld [vmem:[%s2 + $0x54] sm:$0xf]
      %v858 = vld [vmem:[%s2 + $0x58] sm:$0xf]
      %v859 = vld [vmem:[%s2 + $0x5c] sm:$0xf]
      %v860 = vld [vmem:[%s2 + $0x60] sm:$0xf]
      %v861 = vld [vmem:[%s2 + $0x64] sm:$0xf]
      %v862 = vld [vmem:[%s2 + $0x68] sm:$0xf]
      %v863 = vld [vmem:[%s2 + $0x6c] sm:$0xf]
      %v864 = vld [vmem:[%s2 + $0x70] sm:$0xf]
      %v865 = vld [vmem:[%s2 + $0x74] sm:$0xf]
      %v866 = vld [vmem:[%s2 + $0x78] sm:$0xf]
      %v867 = vld [vmem:[%s2 + $0x7c] sm:$0xf]
      %v868 = vld [vmem:[%s2 + $0x80] sm:$0xf]
      %v869 = vld [vmem:[%s2 + $0x84] sm:$0xf]
      %v870 = vld [vmem:[%s2 + $0x88] sm:$0xf]
      %v871 = vld [vmem:[%s2 + $0x8c] sm:$0xf]
      %v872 = vld [vmem:[%s2 + $0x90] sm:$0xf]
      %v873 = vld [vmem:[%s2 + $0x94] sm:$0xf]
      %v874 = vld [vmem:[%s2 + $0x98] sm:$0xf]
      %v875 = vld [vmem:[%s2 + $0x9c] sm:$0xf]
      %v876 = vld [vmem:[%s2 + $0xa0] sm:$0xf]
      %v877 = vld [vmem:[%s2 + $0xa4] sm:$0xf]
      %v878 = vld [vmem:[%s2 + $0xa8] sm:$0xf]
      %v879 = vld [vmem:[%s2 + $0xac] sm:$0xf]
      %v880 = vld [vmem:[%s2 + $0xb0] sm:$0xf]
      %v881 = vld [vmem:[%s2 + $0xb4] sm:$0xf]
      %v882 = vld [vmem:[%s2 + $0xb8] sm:$0xf]
      %v883 = vld [vmem:[%s2 + $0xbc] sm:$0xf]
      %v884 = vld [vmem:[%s2 + $0xc0] sm:$0xf]
      %v885 = vld [vmem:[%s2 + $0xc4] sm:$0xf]
      %v886 = vld [vmem:[%s2 + $0xc8] sm:$0xf]
      %v887 = vld [vmem:[%s2 + $0xcc] sm:$0xf]
      %v888 = vld [vmem:[%s2 + $0xd0] sm:$0xf]
      %v889 = vld [vmem:[%s2 + $0xd4] sm:$0xf]
      %v890 = vld [vmem:[%s2 + $0xd8] sm:$0xf]
      %v891 = vld [vmem:[%s2 + $0xdc] sm:$0xf]
      %v892 = vld [vmem:[%s2 + $0xe0] sm:$0xf]
      %v893 = vld [vmem:[%s2 + $0xe4] sm:$0xf]
      %v894 = vld [vmem:[%s2 + $0xe8] sm:$0xf]
      %v895 = vld [vmem:[%s2 + $0xec] sm:$0xf]
      %v896 = vld [vmem:[%s2 + $0xf0] sm:$0xf]
      %v897 = vld [vmem:[%s2 + $0xf4] sm:$0xf]
      %v898 = vld [vmem:[%s2 + $0xf8] sm:$0xf]
      %v899 = vld [vmem:[%s2 + $0xfc] sm:$0xf]
      %v900 = vld [vmem:[%s2 + $0x100] sm:$0xf]
      %v901 = vld [vmem:[%s2 + $0x104] sm:$0xf]
      %v902 = vld [vmem:[%s2 + $0x108] sm:$0xf]
      %v903 = vld [vmem:[%s2 + $0x10c] sm:$0xf]
      %v904 = vld [vmem:[%s2 + $0x110] sm:$0xf]
      %v905 = vld [vmem:[%s2 + $0x114] sm:$0xf]
      %v906 = vld [vmem:[%s2 + $0x118] sm:$0xf]
      %v907 = vld [vmem:[%s2 + $0x11c] sm:$0xf]
      %v908 = vld [vmem:[%s2 + $0x120] sm:$0xf]
      %v909 = vld [vmem:[%s2 + $0x124] sm:$0xf]
      %v910 = vld [vmem:[%s2 + $0x128] sm:$0xf]
      %v911 = vld [vmem:[%s2 + $0x12c] sm:$0xf]
      %v912 = vld [vmem:[%s2 + $0x130] sm:$0xf]
      %v913 = vld [vmem:[%s2 + $0x134] sm:$0xf]
      %v914 = vld [vmem:[%s2 + $0x138] sm:$0xf]
      %v915 = vld [vmem:[%s2 + $0x13c] sm:$0xf]
      %v916 = vld [vmem:[%s2 + $0x140] sm:$0xf]
      %v917 = vld [vmem:[%s2 + $0x144] sm:$0xf]
      %v918 = vld [vmem:[%s2 + $0x148] sm:$0xf]
      %v919 = vld [vmem:[%s2 + $0x14c] sm:$0xf]
      %v920 = vld [vmem:[%s2 + $0x150] sm:$0xf]
      %v921 = vld [vmem:[%s2 + $0x154] sm:$0xf]
      %v922 = vld [vmem:[%s2 + $0x158] sm:$0xf]
      %v923 = vld [vmem:[%s2 + $0x15c] sm:$0xf]
      %v924 = vld [vmem:[%s2 + $0x160] sm:$0xf]
      %v925 = vld [vmem:[%s2 + $0x164] sm:$0xf]
      %v926 = vld [vmem:[%s2 + $0x168] sm:$0xf]
      %v927 = vld [vmem:[%s2 + $0x16c] sm:$0xf]
      %v928 = vld [vmem:[%s2 + $0x170] sm:$0xf]
      %v929 = vld [vmem:[%s2 + $0x174] sm:$0xf]
      %v930 = vld [vmem:[%s2 + $0x178] sm:$0xf]
      %v931 = vld [vmem:[%s2 + $0x17c] sm:$0xf]
      %v932 = vld [vmem:[%s2 + $0x180] sm:$0xf]
      %v933 = vld [vmem:[%s2 + $0x184] sm:$0xf]
      %v934 = vld [vmem:[%s2 + $0x188] sm:$0xf]
      %v935 = vld [vmem:[%s2 + $0x18c] sm:$0xf]
      %v936 = vld [vmem:[%s2 + $0x190] sm:$0xf]
      %v937 = vld [vmem:[%s2 + $0x194] sm:$0xf]
      %v938 = vld [vmem:[%s2 + $0x198] sm:$0xf]
      %v939 = vld [vmem:[%s2 + $0x19c] sm:$0xf]
      %v940 = vld [vmem:[%s2 + $0x1a0] sm:$0xf]
      %v941 = vld [vmem:[%s2 + $0x1a4] sm:$0xf]
      %v942 = vld [vmem:[%s2 + $0x1a8] sm:$0xf]
      %v943 = vld [vmem:[%s2 + $0x1ac] sm:$0xf]
      %v944 = vld [vmem:[%s2 + $0x1b0] sm:$0xf]
      %v945 = vld [vmem:[%s2 + $0x1b4] sm:$0xf]
      %v946 = vld [vmem:[%s2 + $0x1b8] sm:$0xf]
      %v947 = vld [vmem:[%s2 + $0x1bc] sm:$0xf]
      %v948 = vld [vmem:[%s2 + $0x1c0] sm:$0xf]
      %v949 = vld [vmem:[%s2 + $0x1c4] sm:$0xf]
      %v950 = vld [vmem:[%s2 + $0x1c8] sm:$0xf]
      %v951 = vld [vmem:[%s2 + $0x1cc] sm:$0xf]
      %v952 = vld [vmem:[%s2 + $0x1d0] sm:$0xf]
      %v953 = vld [vmem:[%s2 + $0x1d4] sm:$0xf]
      %v954 = vld [vmem:[%s2 + $0x1d8] sm:$0xf]
      %v955 = vld [vmem:[%s2 + $0x1dc] sm:$0xf]
      %v956 = vld [vmem:[%s2 + $0x1e0] sm:$0xf]
      %v957 = vld [vmem:[%s2 + $0x1e4] sm:$0xf]
      %v958 = vld [vmem:[%s2 + $0x1e8] sm:$0xf]
      %v959 = vld [vmem:[%s2 + $0x1ec] sm:$0xf]
      %v960 = vld [vmem:[%s2 + $0x1f0] sm:$0xf]
      %v961 = vld [vmem:[%s2 + $0x1f4] sm:$0xf]
      %v962 = vld [vmem:[%s2 + $0x1f8] sm:$0xf]
      %v963 = vld [vmem:[%s2 + $0x1fc] sm:$0xf]
      %v964 = vld [vmem:[%s242] sm:$0xff]
      %v965 = vld [vmem:[%s242 + $0x8] sm:$0xff]
      %v966 = vld [vmem:[%s242 + $0x10] sm:$0xff]
      %v967 = vld [vmem:[%s242 + $0x18] sm:$0xff]
      %v968 = vld [vmem:[%s242 + $0x20] sm:$0xff]
      %v969 = vld [vmem:[%s242 + $0x28] sm:$0xff]
      %v970 = vld [vmem:[%s242 + $0x30] sm:$0xff]
      %v971 = vld [vmem:[%s242 + $0x38] sm:$0xff]
      %v972 = vld [vmem:[%s242 + $0x40] sm:$0xff]
      %v973 = vld [vmem:[%s242 + $0x48] sm:$0xff]
      %v974 = vld [vmem:[%s242 + $0x50] sm:$0xff]
      %v975 = vld [vmem:[%s242 + $0x58] sm:$0xff]
      %v976 = vld [vmem:[%s242 + $0x60] sm:$0xff]
      %v977 = vld [vmem:[%s242 + $0x68] sm:$0xff]
      %v978 = vld [vmem:[%s242 + $0x70] sm:$0xff]
      %v979 = vld [vmem:[%s242 + $0x78] sm:$0xff]
      %v980 = vld [vmem:[%s3] sm:$0x1]
      %982 = vset.pattern.permute.xlu0 0
      %983 = vperm.xlu0 %982, %v964
      %v984 = vpop.permute.xlu0 %983
      %987 = vset.pattern.permute.xlu0 0
      %988 = vperm.xlu0 %987, %v965
      %v989 = vpop.permute.xlu0 %988
      %992 = vset.pattern.permute.xlu0 0
      %993 = vperm.xlu0 %992, %v966
      %v994 = vpop.permute.xlu0 %993
      %997 = vset.pattern.permute.xlu0 0
      %998 = vperm.xlu0 %997, %v967
      %v999 = vpop.permute.xlu0 %998
      %1002 = vset.pattern.permute.xlu0 0
      %1003 = vperm.xlu0 %1002, %v968
      %v1004 = vpop.permute.xlu0 %1003
      %1007 = vset.pattern.permute.xlu0 0
      %1008 = vperm.xlu0 %1007, %v969
      %v1009 = vpop.permute.xlu0 %1008
      %1012 = vset.pattern.permute.xlu0 0
      %1013 = vperm.xlu0 %1012, %v970
      %v1014 = vpop.permute.xlu0 %1013
      %1017 = vset.pattern.permute.xlu0 0
      %1018 = vperm.xlu0 %1017, %v971
      %v1019 = vpop.permute.xlu0 %1018
      %1022 = vset.pattern.permute.xlu0 0
      %1023 = vperm.xlu0 %1022, %v972
      %v1024 = vpop.permute.xlu0 %1023
      %1027 = vset.pattern.permute.xlu0 0
      %1028 = vperm.xlu0 %1027, %v973
      %v1029 = vpop.permute.xlu0 %1028
      %1032 = vset.pattern.permute.xlu0 0
      %1033 = vperm.xlu0 %1032, %v974
      %v1034 = vpop.permute.xlu0 %1033
      %1037 = vset.pattern.permute.xlu0 0
      %1038 = vperm.xlu0 %1037, %v975
      %v1039 = vpop.permute.xlu0 %1038
      %1042 = vset.pattern.permute.xlu0 0
      %1043 = vperm.xlu0 %1042, %v976
      %v1044 = vpop.permute.xlu0 %1043
      %1047 = vset.pattern.permute.xlu0 0
      %1048 = vperm.xlu0 %1047, %v977
      %v1049 = vpop.permute.xlu0 %1048
      %1052 = vset.pattern.permute.xlu0 0
      %1053 = vperm.xlu0 %1052, %v978
      %v1054 = vpop.permute.xlu0 %1053
      %1057 = vset.pattern.permute.xlu0 0
      %1058 = vperm.xlu0 %1057, %v979
      %v1059 = vpop.permute.xlu0 %1058
      %v1062 = vlaneseq
      %v1063 = vshrl.u32 %v1062, 7
      %v1064 = vsub.s32 0, %v1063
      %v1065 = vrot.slane %v980, %v1064
      %v1067 = vmul.f32 %v984, %v1065
      %v1068 = vmul.f32 %v989, %v1065
      %v1069 = vmul.f32 %v994, %v1065
      %v1070 = vmul.f32 %v999, %v1065
      %v1071 = vmul.f32 %v1004, %v1065
      %v1072 = vmul.f32 %v1009, %v1065
      %v1073 = vmul.f32 %v1014, %v1065
      %v1074 = vmul.f32 %v1019, %v1065
      %v1075 = vmul.f32 %v1024, %v1065
      %v1076 = vmul.f32 %v1029, %v1065
      %v1077 = vmul.f32 %v1034, %v1065
      %v1078 = vmul.f32 %v1039, %v1065
      %v1079 = vmul.f32 %v1044, %v1065
      %v1080 = vmul.f32 %v1049, %v1065
      %v1081 = vmul.f32 %v1054, %v1065
      %v1082 = vmul.f32 %v1059, %v1065
      %v1211 = vunpack.c.l.b16 %v836
      %v1212 = vunpack.c.l.b16 %v837
      %v1213 = vunpack.c.l.b16 %v838
      %v1214 = vunpack.c.l.b16 %v839
      %v1215 = vunpack.c.l.b16 %v840
      %v1216 = vunpack.c.l.b16 %v841
      %v1217 = vunpack.c.l.b16 %v842
      %v1218 = vunpack.c.l.b16 %v843
      %v1219 = vunpack.c.l.b16 %v844
      %v1220 = vunpack.c.l.b16 %v845
      %v1221 = vunpack.c.l.b16 %v846
      %v1222 = vunpack.c.l.b16 %v847
      %v1223 = vunpack.c.l.b16 %v848
      %v1224 = vunpack.c.l.b16 %v849
      %v1225 = vunpack.c.l.b16 %v850
      %v1226 = vunpack.c.l.b16 %v851
      %v1227 = vunpack.c.l.b16 %v852
      %v1228 = vunpack.c.l.b16 %v853
      %v1229 = vunpack.c.l.b16 %v854
      %v1230 = vunpack.c.l.b16 %v855
      %v1231 = vunpack.c.l.b16 %v856
      %v1232 = vunpack.c.l.b16 %v857
      %v1233 = vunpack.c.l.b16 %v858
      %v1234 = vunpack.c.l.b16 %v859
      %v1235 = vunpack.c.l.b16 %v860
      %v1236 = vunpack.c.l.b16 %v861
      %v1237 = vunpack.c.l.b16 %v862
      %v1238 = vunpack.c.l.b16 %v863
      %v1239 = vunpack.c.l.b16 %v864
      %v1240 = vunpack.c.l.b16 %v865
      %v1241 = vunpack.c.l.b16 %v866
      %v1242 = vunpack.c.l.b16 %v867
      %v1243 = vunpack.c.l.b16 %v868
      %v1244 = vunpack.c.l.b16 %v869
      %v1245 = vunpack.c.l.b16 %v870
      %v1246 = vunpack.c.l.b16 %v871
      %v1247 = vunpack.c.l.b16 %v872
      %v1248 = vunpack.c.l.b16 %v873
      %v1249 = vunpack.c.l.b16 %v874
      %v1250 = vunpack.c.l.b16 %v875
      %v1251 = vunpack.c.l.b16 %v876
      %v1252 = vunpack.c.l.b16 %v877
      %v1253 = vunpack.c.l.b16 %v878
      %v1254 = vunpack.c.l.b16 %v879
      %v1255 = vunpack.c.l.b16 %v880
      %v1256 = vunpack.c.l.b16 %v881
      %v1257 = vunpack.c.l.b16 %v882
      %v1258 = vunpack.c.l.b16 %v883
      %v1259 = vunpack.c.l.b16 %v884
      %v1260 = vunpack.c.l.b16 %v885
      %v1261 = vunpack.c.l.b16 %v886
      %v1262 = vunpack.c.l.b16 %v887
      %v1263 = vunpack.c.l.b16 %v888
      %v1264 = vunpack.c.l.b16 %v889
      %v1265 = vunpack.c.l.b16 %v890
      %v1266 = vunpack.c.l.b16 %v891
      %v1267 = vunpack.c.l.b16 %v892
      %v1268 = vunpack.c.l.b16 %v893
      %v1269 = vunpack.c.l.b16 %v894
      %v1270 = vunpack.c.l.b16 %v895
      %v1271 = vunpack.c.l.b16 %v896
      %v1272 = vunpack.c.l.b16 %v897
      %v1273 = vunpack.c.l.b16 %v898
      %v1274 = vunpack.c.l.b16 %v899
      %v1275 = vunpack.c.l.b16 %v900
      %v1276 = vunpack.c.l.b16 %v901
      %v1277 = vunpack.c.l.b16 %v902
      %v1278 = vunpack.c.l.b16 %v903
      %v1279 = vunpack.c.l.b16 %v904
      %v1280 = vunpack.c.l.b16 %v905
      %v1281 = vunpack.c.l.b16 %v906
      %v1282 = vunpack.c.l.b16 %v907
      %v1283 = vunpack.c.l.b16 %v908
      %v1284 = vunpack.c.l.b16 %v909
      %v1285 = vunpack.c.l.b16 %v910
      %v1286 = vunpack.c.l.b16 %v911
      %v1287 = vunpack.c.l.b16 %v912
      %v1288 = vunpack.c.l.b16 %v913
      %v1289 = vunpack.c.l.b16 %v914
      %v1290 = vunpack.c.l.b16 %v915
      %v1291 = vunpack.c.l.b16 %v916
      %v1292 = vunpack.c.l.b16 %v917
      %v1293 = vunpack.c.l.b16 %v918
      %v1294 = vunpack.c.l.b16 %v919
      %v1295 = vunpack.c.l.b16 %v920
      %v1296 = vunpack.c.l.b16 %v921
      %v1297 = vunpack.c.l.b16 %v922
      %v1298 = vunpack.c.l.b16 %v923
      %v1299 = vunpack.c.l.b16 %v924
      %v1300 = vunpack.c.l.b16 %v925
      %v1301 = vunpack.c.l.b16 %v926
      %v1302 = vunpack.c.l.b16 %v927
      %v1303 = vunpack.c.l.b16 %v928
      %v1304 = vunpack.c.l.b16 %v929
      %v1305 = vunpack.c.l.b16 %v930
      %v1306 = vunpack.c.l.b16 %v931
      %v1307 = vunpack.c.l.b16 %v932
      %v1308 = vunpack.c.l.b16 %v933
      %v1309 = vunpack.c.l.b16 %v934
      %v1310 = vunpack.c.l.b16 %v935
      %v1311 = vunpack.c.l.b16 %v936
      %v1312 = vunpack.c.l.b16 %v937
      %v1313 = vunpack.c.l.b16 %v938
      %v1314 = vunpack.c.l.b16 %v939
      %v1315 = vunpack.c.l.b16 %v940
      %v1316 = vunpack.c.l.b16 %v941
      %v1317 = vunpack.c.l.b16 %v942
      %v1318 = vunpack.c.l.b16 %v943
      %v1319 = vunpack.c.l.b16 %v944
      %v1320 = vunpack.c.l.b16 %v945
      %v1321 = vunpack.c.l.b16 %v946
      %v1322 = vunpack.c.l.b16 %v947
      %v1323 = vunpack.c.l.b16 %v948
      %v1324 = vunpack.c.l.b16 %v949
      %v1325 = vunpack.c.l.b16 %v950
      %v1326 = vunpack.c.l.b16 %v951
      %v1327 = vunpack.c.l.b16 %v952
      %v1328 = vunpack.c.l.b16 %v953
      %v1329 = vunpack.c.l.b16 %v954
      %v1330 = vunpack.c.l.b16 %v955
      %v1331 = vunpack.c.l.b16 %v956
      %v1332 = vunpack.c.l.b16 %v957
      %v1333 = vunpack.c.l.b16 %v958
      %v1334 = vunpack.c.l.b16 %v959
      %v1335 = vunpack.c.l.b16 %v960
      %v1336 = vunpack.c.l.b16 %v961
      %v1337 = vunpack.c.l.b16 %v962
      %v1338 = vunpack.c.l.b16 %v963
      %v1339 = vpack.c.b16 %v1212, %v1211
      %v1340 = vpack.c.b16 %v1214, %v1213
      %v1341 = vpack.c.b16 %v1216, %v1215
      %v1342 = vpack.c.b16 %v1218, %v1217
      %v1343 = vpack.c.b16 %v1220, %v1219
      %v1344 = vpack.c.b16 %v1222, %v1221
      %v1345 = vpack.c.b16 %v1224, %v1223
      %v1346 = vpack.c.b16 %v1226, %v1225
      %v1347 = vpack.c.b16 %v1228, %v1227
      %v1348 = vpack.c.b16 %v1230, %v1229
      %v1349 = vpack.c.b16 %v1232, %v1231
      %v1350 = vpack.c.b16 %v1234, %v1233
      %v1351 = vpack.c.b16 %v1236, %v1235
      %v1352 = vpack.c.b16 %v1238, %v1237
      %v1353 = vpack.c.b16 %v1240, %v1239
      %v1354 = vpack.c.b16 %v1242, %v1241
      %v1355 = vpack.c.b16 %v1244, %v1243
      %v1356 = vpack.c.b16 %v1246, %v1245
      %v1357 = vpack.c.b16 %v1248, %v1247
      %v1358 = vpack.c.b16 %v1250, %v1249
      %v1359 = vpack.c.b16 %v1252, %v1251
      %v1360 = vpack.c.b16 %v1254, %v1253
      %v1361 = vpack.c.b16 %v1256, %v1255
      %v1362 = vpack.c.b16 %v1258, %v1257
      %v1363 = vpack.c.b16 %v1260, %v1259
      %v1364 = vpack.c.b16 %v1262, %v1261
      %v1365 = vpack.c.b16 %v1264, %v1263
      %v1366 = vpack.c.b16 %v1266, %v1265
      %v1367 = vpack.c.b16 %v1268, %v1267
      %v1368 = vpack.c.b16 %v1270, %v1269
      %v1369 = vpack.c.b16 %v1272, %v1271
      %v1370 = vpack.c.b16 %v1274, %v1273
      %v1371 = vpack.c.b16 %v1276, %v1275
      %v1372 = vpack.c.b16 %v1278, %v1277
      %v1373 = vpack.c.b16 %v1280, %v1279
      %v1374 = vpack.c.b16 %v1282, %v1281
      %v1375 = vpack.c.b16 %v1284, %v1283
      %v1376 = vpack.c.b16 %v1286, %v1285
      %v1377 = vpack.c.b16 %v1288, %v1287
      %v1378 = vpack.c.b16 %v1290, %v1289
      %v1379 = vpack.c.b16 %v1292, %v1291
      %v1380 = vpack.c.b16 %v1294, %v1293
      %v1381 = vpack.c.b16 %v1296, %v1295
      %v1382 = vpack.c.b16 %v1298, %v1297
      %v1383 = vpack.c.b16 %v1300, %v1299
      %v1384 = vpack.c.b16 %v1302, %v1301
      %v1385 = vpack.c.b16 %v1304, %v1303
      %v1386 = vpack.c.b16 %v1306, %v1305
      %v1387 = vpack.c.b16 %v1308, %v1307
      %v1388 = vpack.c.b16 %v1310, %v1309
      %v1389 = vpack.c.b16 %v1312, %v1311
      %v1390 = vpack.c.b16 %v1314, %v1313
      %v1391 = vpack.c.b16 %v1316, %v1315
      %v1392 = vpack.c.b16 %v1318, %v1317
      %v1393 = vpack.c.b16 %v1320, %v1319
      %v1394 = vpack.c.b16 %v1322, %v1321
      %v1395 = vpack.c.b16 %v1324, %v1323
      %v1396 = vpack.c.b16 %v1326, %v1325
      %v1397 = vpack.c.b16 %v1328, %v1327
      %v1398 = vpack.c.b16 %v1330, %v1329
      %v1399 = vpack.c.b16 %v1332, %v1331
      %v1400 = vpack.c.b16 %v1334, %v1333
      %v1401 = vpack.c.b16 %v1336, %v1335
      %v1402 = vpack.c.b16 %v1338, %v1337
      %1467 = vmatprep.subr.bf16.mxu0 0
      %1468 = vmatpush1.bf16.msra.mxu0 %v1346
      %1469 = vmatprep.subr.bf16.mxu0 0
      %1470 = vmatpush1.bf16.msra.mxu0 %v1345
      %1471 = vmatprep.subr.bf16.mxu0 0
      %1472 = vmatpush1.bf16.msra.mxu0 %v1344
      %1473 = vmatprep.subr.bf16.mxu0 0
      %1474 = vmatpush1.bf16.msra.mxu0 %v1343
      %1475 = vmatprep.subr.bf16.mxu0 0
      %1476 = vmatpush1.bf16.msra.mxu0 %v1342
      %1477 = vmatprep.subr.bf16.mxu0 0
      %1478 = vmatpush1.bf16.msra.mxu0 %v1341
      %1479 = vmatprep.subr.bf16.mxu0 0
      %1480 = vmatpush1.bf16.msra.mxu0 %v1340
      %1481 = vmatprep.subr.bf16.mxu0 0
      %1482 = vmatpush1.bf16.msra.mxu0 %v1339
      %1483 = vmatprep.subr.bf16.mxu0 0
      %1484 = vmatpush2.bf16.msra.mxu0 %v1354
      %1485 = vmatprep.subr.bf16.mxu0 0
      %1486 = vmatpush2.bf16.msra.mxu0 %v1353
      %1487 = vmatprep.subr.bf16.mxu0 0
      %1488 = vmatpush2.bf16.msra.mxu0 %v1352
      %1489 = vmatprep.subr.bf16.mxu0 0
      %1490 = vmatpush2.bf16.msra.mxu0 %v1351
      %1491 = vmatprep.subr.bf16.mxu0 0
      %1492 = vmatpush2.bf16.msra.mxu0 %v1350
      %1493 = vmatprep.subr.bf16.mxu0 0
      %1494 = vmatpush2.bf16.msra.mxu0 %v1349
      %1495 = vmatprep.subr.bf16.mxu0 0
      %1496 = vmatpush2.bf16.msra.mxu0 %v1348
      %1497 = vmatprep.subr.bf16.mxu0 0
      %1498 = vmatpush2.bf16.msra.mxu0 %v1347
      %1499 = vmatprep.mubr.bf16.mxu0 %v773
      %1500 = vmatmul.mubr.bf16.gmra.mxu0 %v772
      %v1501 = vpop.f32.mrf.mxu0
      %v1502 = vadd.f32 %v1067, %v1501
      %v1503 = vpop.f32.mrf.mxu0
      %v1504 = vpop.f32.mrf.mxu0
      %v1505 = vadd.f32 %v1068, %v1504
      %v1506 = vpop.f32.mrf.mxu0
      %1507 = vmatprep.mubr.bf16.mxu0 %v781
      %1508 = vmatmul.mubr.bf16.gmra.mxu0 %v780
      %v1509 = vpop.f32.mrf.mxu0
      %v1510 = vadd.f32 %v1069, %v1509
      %v1511 = vpop.f32.mrf.mxu0
      %v1512 = vpop.f32.mrf.mxu0
      %v1513 = vadd.f32 %v1070, %v1512
      %v1514 = vpop.f32.mrf.mxu0
      %1515 = vmatprep.mubr.bf16.mxu0 %v789
      %1516 = vmatmul.mubr.bf16.gmra.mxu0 %v788
      %v1517 = vpop.f32.mrf.mxu0
      %v1518 = vadd.f32 %v1071, %v1517
      %v1519 = vpop.f32.mrf.mxu0
      %v1520 = vpop.f32.mrf.mxu0
      %v1521 = vadd.f32 %v1072, %v1520
      %v1522 = vpop.f32.mrf.mxu0
      %1523 = vmatprep.mubr.bf16.mxu0 %v797
      %1524 = vmatmul.mubr.bf16.gmra.mxu0 %v796
      %v1525 = vpop.f32.mrf.mxu0
      %v1526 = vadd.f32 %v1073, %v1525
      %v1527 = vpop.f32.mrf.mxu0
      %v1528 = vpop.f32.mrf.mxu0
      %v1529 = vadd.f32 %v1074, %v1528
      %v1530 = vpop.f32.mrf.mxu0
      %1531 = vmatprep.mubr.bf16.mxu0 %v805
      %1532 = vmatmul.mubr.bf16.gmra.mxu0 %v804
      %v1533 = vpop.f32.mrf.mxu0
      %v1534 = vadd.f32 %v1075, %v1533
      %v1535 = vpop.f32.mrf.mxu0
      %v1536 = vpop.f32.mrf.mxu0
      %v1537 = vadd.f32 %v1076, %v1536
      %v1538 = vpop.f32.mrf.mxu0
      %1539 = vmatprep.mubr.bf16.mxu0 %v813
      %1540 = vmatmul.mubr.bf16.gmra.mxu0 %v812
      %v1541 = vpop.f32.mrf.mxu0
      %v1542 = vadd.f32 %v1077, %v1541
      %v1543 = vpop.f32.mrf.mxu0
      %v1544 = vpop.f32.mrf.mxu0
      %v1545 = vadd.f32 %v1078, %v1544
      %v1546 = vpop.f32.mrf.mxu0
      %1547 = vmatprep.mubr.bf16.mxu0 %v821
      %1548 = vmatmul.mubr.bf16.gmra.mxu0 %v820
      %v1549 = vpop.f32.mrf.mxu0
      %v1550 = vadd.f32 %v1079, %v1549
      %v1551 = vpop.f32.mrf.mxu0
      %v1552 = vpop.f32.mrf.mxu0
      %v1553 = vadd.f32 %v1080, %v1552
      %v1554 = vpop.f32.mrf.mxu0
      %1555 = vmatprep.mubr.bf16.mxu0 %v829
      %1556 = vmatmul.mubr.bf16.gmra.mxu0 %v828
      %v1557 = vpop.f32.mrf.mxu0
      %v1558 = vadd.f32 %v1081, %v1557
      %v1559 = vpop.f32.mrf.mxu0
      %v1560 = vpop.f32.mrf.mxu0
      %v1561 = vadd.f32 %v1082, %v1560
      %v1562 = vpop.f32.mrf.mxu0
      %1563 = vdwg.mxu0
      %1564 = vmatprep.subr.bf16.mxu0 0
      %1565 = vmatpush1.bf16.msra.mxu0 %v1362
      %1566 = vmatprep.subr.bf16.mxu0 0
      %1567 = vmatpush1.bf16.msra.mxu0 %v1361
      %1568 = vmatprep.subr.bf16.mxu0 0
      %1569 = vmatpush1.bf16.msra.mxu0 %v1360
      %1570 = vmatprep.subr.bf16.mxu0 0
      %1571 = vmatpush1.bf16.msra.mxu0 %v1359
      %1572 = vmatprep.subr.bf16.mxu0 0
      %1573 = vmatpush1.bf16.msra.mxu0 %v1358
      %1574 = vmatprep.subr.bf16.mxu0 0
      %1575 = vmatpush1.bf16.msra.mxu0 %v1357
      %1576 = vmatprep.subr.bf16.mxu0 0
      %1577 = vmatpush1.bf16.msra.mxu0 %v1356
      %1578 = vmatprep.subr.bf16.mxu0 0
      %1579 = vmatpush1.bf16.msra.mxu0 %v1355
      %1580 = vmatprep.subr.bf16.mxu0 0
      %1581 = vmatpush2.bf16.msra.mxu0 %v1370
      %1582 = vmatprep.subr.bf16.mxu0 0
      %1583 = vmatpush2.bf16.msra.mxu0 %v1369
      %1584 = vmatprep.subr.bf16.mxu0 0
      %1585 = vmatpush2.bf16.msra.mxu0 %v1368
      %1586 = vmatprep.subr.bf16.mxu0 0
      %1587 = vmatpush2.bf16.msra.mxu0 %v1367
      %1588 = vmatprep.subr.bf16.mxu0 0
      %1589 = vmatpush2.bf16.msra.mxu0 %v1366
      %1590 = vmatprep.subr.bf16.mxu0 0
      %1591 = vmatpush2.bf16.msra.mxu0 %v1365
      %1592 = vmatprep.subr.bf16.mxu0 0
      %1593 = vmatpush2.bf16.msra.mxu0 %v1364
      %1594 = vmatprep.subr.bf16.mxu0 0
      %1595 = vmatpush2.bf16.msra.mxu0 %v1363
      %1596 = vmatprep.mubr.bf16.mxu0 %v775
      %1597 = vmatmul.mubr.bf16.gmra.mxu0 %v774
      %v1598 = vpop.f32.mrf.mxu0
      %v1599 = vadd.f32 %v1502, %v1598
      %v1600 = vpop.f32.mrf.mxu0
      %v1601 = vpop.f32.mrf.mxu0
      %v1602 = vadd.f32 %v1505, %v1601
      %v1603 = vpop.f32.mrf.mxu0
      %1604 = vmatprep.mubr.bf16.mxu0 %v783
      %1605 = vmatmul.mubr.bf16.gmra.mxu0 %v782
      %v1606 = vpop.f32.mrf.mxu0
      %v1607 = vadd.f32 %v1510, %v1606
      %v1608 = vpop.f32.mrf.mxu0
      %v1609 = vpop.f32.mrf.mxu0
      %v1610 = vadd.f32 %v1513, %v1609
      %v1611 = vpop.f32.mrf.mxu0
      %1612 = vmatprep.mubr.bf16.mxu0 %v791
      %1613 = vmatmul.mubr.bf16.gmra.mxu0 %v790
      %v1614 = vpop.f32.mrf.mxu0
      %v1615 = vadd.f32 %v1518, %v1614
      %v1616 = vpop.f32.mrf.mxu0
      %v1617 = vpop.f32.mrf.mxu0
      %v1618 = vadd.f32 %v1521, %v1617
      %v1619 = vpop.f32.mrf.mxu0
      %1620 = vmatprep.mubr.bf16.mxu0 %v799
      %1621 = vmatmul.mubr.bf16.gmra.mxu0 %v798
      %v1622 = vpop.f32.mrf.mxu0
      %v1623 = vadd.f32 %v1526, %v1622
      %v1624 = vpop.f32.mrf.mxu0
      %v1625 = vpop.f32.mrf.mxu0
      %v1626 = vadd.f32 %v1529, %v1625
      %v1627 = vpop.f32.mrf.mxu0
      %1628 = vmatprep.mubr.bf16.mxu0 %v807
      %1629 = vmatmul.mubr.bf16.gmra.mxu0 %v806
      %v1630 = vpop.f32.mrf.mxu0
      %v1631 = vadd.f32 %v1534, %v1630
      %v1632 = vpop.f32.mrf.mxu0
      %v1633 = vpop.f32.mrf.mxu0
      %v1634 = vadd.f32 %v1537, %v1633
      %v1635 = vpop.f32.mrf.mxu0
      %1636 = vmatprep.mubr.bf16.mxu0 %v815
      %1637 = vmatmul.mubr.bf16.gmra.mxu0 %v814
      %v1638 = vpop.f32.mrf.mxu0
      %v1639 = vadd.f32 %v1542, %v1638
      %v1640 = vpop.f32.mrf.mxu0
      %v1641 = vpop.f32.mrf.mxu0
      %v1642 = vadd.f32 %v1545, %v1641
      %v1643 = vpop.f32.mrf.mxu0
      %1644 = vmatprep.mubr.bf16.mxu0 %v823
      %1645 = vmatmul.mubr.bf16.gmra.mxu0 %v822
      %v1646 = vpop.f32.mrf.mxu0
      %v1647 = vadd.f32 %v1550, %v1646
      %v1648 = vpop.f32.mrf.mxu0
      %v1649 = vpop.f32.mrf.mxu0
      %v1650 = vadd.f32 %v1553, %v1649
      %v1651 = vpop.f32.mrf.mxu0
      %1652 = vmatprep.mubr.bf16.mxu0 %v831
      %1653 = vmatmul.mubr.bf16.gmra.mxu0 %v830
      %v1654 = vpop.f32.mrf.mxu0
      %v1655 = vadd.f32 %v1558, %v1654
      %v1656 = vpop.f32.mrf.mxu0
      %v1657 = vpop.f32.mrf.mxu0
      %v1658 = vadd.f32 %v1561, %v1657
      %v1659 = vpop.f32.mrf.mxu0
      %1660 = vdwg.mxu0
      %1661 = vmatprep.subr.bf16.mxu0 0
      %1662 = vmatpush1.bf16.msra.mxu0 %v1378
      %1663 = vmatprep.subr.bf16.mxu0 0
      %1664 = vmatpush1.bf16.msra.mxu0 %v1377
      %1665 = vmatprep.subr.bf16.mxu0 0
      %1666 = vmatpush1.bf16.msra.mxu0 %v1376
      %1667 = vmatprep.subr.bf16.mxu0 0
      %1668 = vmatpush1.bf16.msra.mxu0 %v1375
      %1669 = vmatprep.subr.bf16.mxu0 0
      %1670 = vmatpush1.bf16.msra.mxu0 %v1374
      %1671 = vmatprep.subr.bf16.mxu0 0
      %1672 = vmatpush1.bf16.msra.mxu0 %v1373
      %1673 = vmatprep.subr.bf16.mxu0 0
      %1674 = vmatpush1.bf16.msra.mxu0 %v1372
      %1675 = vmatprep.subr.bf16.mxu0 0
      %1676 = vmatpush1.bf16.msra.mxu0 %v1371
      %1677 = vmatprep.subr.bf16.mxu0 0
      %1678 = vmatpush2.bf16.msra.mxu0 %v1386
      %1679 = vmatprep.subr.bf16.mxu0 0
      %1680 = vmatpush2.bf16.msra.mxu0 %v1385
      %1681 = vmatprep.subr.bf16.mxu0 0
      %1682 = vmatpush2.bf16.msra.mxu0 %v1384
      %1683 = vmatprep.subr.bf16.mxu0 0
      %1684 = vmatpush2.bf16.msra.mxu0 %v1383
      %1685 = vmatprep.subr.bf16.mxu0 0
      %1686 = vmatpush2.bf16.msra.mxu0 %v1382
      %1687 = vmatprep.subr.bf16.mxu0 0
      %1688 = vmatpush2.bf16.msra.mxu0 %v1381
      %1689 = vmatprep.subr.bf16.mxu0 0
      %1690 = vmatpush2.bf16.msra.mxu0 %v1380
      %1691 = vmatprep.subr.bf16.mxu0 0
      %1692 = vmatpush2.bf16.msra.mxu0 %v1379
      %1693 = vmatprep.mubr.bf16.mxu0 %v777
      %1694 = vmatmul.mubr.bf16.gmra.mxu0 %v776
      %v1695 = vpop.f32.mrf.mxu0
      %v1696 = vadd.f32 %v1599, %v1695
      %v1697 = vpop.f32.mrf.mxu0
      %v1698 = vpop.f32.mrf.mxu0
      %v1699 = vadd.f32 %v1602, %v1698
      %v1700 = vpop.f32.mrf.mxu0
      %1701 = vmatprep.mubr.bf16.mxu0 %v785
      %1702 = vmatmul.mubr.bf16.gmra.mxu0 %v784
      %v1703 = vpop.f32.mrf.mxu0
      %v1704 = vadd.f32 %v1607, %v1703
      %v1705 = vpop.f32.mrf.mxu0
      %v1706 = vpop.f32.mrf.mxu0
      %v1707 = vadd.f32 %v1610, %v1706
      %v1708 = vpop.f32.mrf.mxu0
      %1709 = vmatprep.mubr.bf16.mxu0 %v793
      %1710 = vmatmul.mubr.bf16.gmra.mxu0 %v792
      %v1711 = vpop.f32.mrf.mxu0
      %v1712 = vadd.f32 %v1615, %v1711
      %v1713 = vpop.f32.mrf.mxu0
      %v1714 = vpop.f32.mrf.mxu0
      %v1715 = vadd.f32 %v1618, %v1714
      %v1716 = vpop.f32.mrf.mxu0
      %1717 = vmatprep.mubr.bf16.mxu0 %v801
      %1718 = vmatmul.mubr.bf16.gmra.mxu0 %v800
      %v1719 = vpop.f32.mrf.mxu0
      %v1720 = vadd.f32 %v1623, %v1719
      %v1721 = vpop.f32.mrf.mxu0
      %v1722 = vpop.f32.mrf.mxu0
      %v1723 = vadd.f32 %v1626, %v1722
      %v1724 = vpop.f32.mrf.mxu0
      %1725 = vmatprep.mubr.bf16.mxu0 %v809
      %1726 = vmatmul.mubr.bf16.gmra.mxu0 %v808
      %v1727 = vpop.f32.mrf.mxu0
      %v1728 = vadd.f32 %v1631, %v1727
      %v1729 = vpop.f32.mrf.mxu0
      %v1730 = vpop.f32.mrf.mxu0
      %v1731 = vadd.f32 %v1634, %v1730
      %v1732 = vpop.f32.mrf.mxu0
      %1733 = vmatprep.mubr.bf16.mxu0 %v817
      %1734 = vmatmul.mubr.bf16.gmra.mxu0 %v816
      %v1735 = vpop.f32.mrf.mxu0
      %v1736 = vadd.f32 %v1639, %v1735
      %v1737 = vpop.f32.mrf.mxu0
      %v1738 = vpop.f32.mrf.mxu0
      %v1739 = vadd.f32 %v1642, %v1738
      %v1740 = vpop.f32.mrf.mxu0
      %1741 = vmatprep.mubr.bf16.mxu0 %v825
      %1742 = vmatmul.mubr.bf16.gmra.mxu0 %v824
      %v1743 = vpop.f32.mrf.mxu0
      %v1744 = vadd.f32 %v1647, %v1743
      %v1745 = vpop.f32.mrf.mxu0
      %v1746 = vpop.f32.mrf.mxu0
      %v1747 = vadd.f32 %v1650, %v1746
      %v1748 = vpop.f32.mrf.mxu0
      %1749 = vmatprep.mubr.bf16.mxu0 %v833
      %1750 = vmatmul.mubr.bf16.gmra.mxu0 %v832
      %v1751 = vpop.f32.mrf.mxu0
      %v1752 = vadd.f32 %v1655, %v1751
      %v1753 = vpop.f32.mrf.mxu0
      %v1754 = vpop.f32.mrf.mxu0
      %v1755 = vadd.f32 %v1658, %v1754
      %v1756 = vpop.f32.mrf.mxu0
      %1757 = vdwg.mxu0
      %1758 = vmatprep.subr.bf16.mxu0 0
      %1759 = vmatpush1.bf16.msra.mxu0 %v1394
      %1760 = vmatprep.subr.bf16.mxu0 0
      %1761 = vmatpush1.bf16.msra.mxu0 %v1393
      %1762 = vmatprep.subr.bf16.mxu0 0
      %1763 = vmatpush1.bf16.msra.mxu0 %v1392
      %1764 = vmatprep.subr.bf16.mxu0 0
      %1765 = vmatpush1.bf16.msra.mxu0 %v1391
      %1766 = vmatprep.subr.bf16.mxu0 0
      %1767 = vmatpush1.bf16.msra.mxu0 %v1390
      %1768 = vmatprep.subr.bf16.mxu0 0
      %1769 = vmatpush1.bf16.msra.mxu0 %v1389
      %1770 = vmatprep.subr.bf16.mxu0 0
      %1771 = vmatpush1.bf16.msra.mxu0 %v1388
      %1772 = vmatprep.subr.bf16.mxu0 0
      %1773 = vmatpush1.bf16.msra.mxu0 %v1387
      %1774 = vmatprep.subr.bf16.mxu0 0
      %1775 = vmatpush2.bf16.msra.mxu0 %v1402
      %1776 = vmatprep.subr.bf16.mxu0 0
      %1777 = vmatpush2.bf16.msra.mxu0 %v1401
      %1778 = vmatprep.subr.bf16.mxu0 0
      %1779 = vmatpush2.bf16.msra.mxu0 %v1400
      %1780 = vmatprep.subr.bf16.mxu0 0
      %1781 = vmatpush2.bf16.msra.mxu0 %v1399
      %1782 = vmatprep.subr.bf16.mxu0 0
      %1783 = vmatpush2.bf16.msra.mxu0 %v1398
      %1784 = vmatprep.subr.bf16.mxu0 0
      %1785 = vmatpush2.bf16.msra.mxu0 %v1397
      %1786 = vmatprep.subr.bf16.mxu0 0
      %1787 = vmatpush2.bf16.msra.mxu0 %v1396
      %1788 = vmatprep.subr.bf16.mxu0 0
      %1789 = vmatpush2.bf16.msra.mxu0 %v1395
      %1790 = vmatprep.mubr.bf16.mxu0 %v779
      %1791 = vmatmul.mubr.bf16.gmra.mxu0 %v778
      %v1792 = vpop.f32.mrf.mxu0
      %v1793 = vadd.f32 %v1696, %v1792
      %v1794 = vpop.f32.mrf.mxu0
      %v1795 = vpop.f32.mrf.mxu0
      %v1796 = vadd.f32 %v1699, %v1795
      %v1797 = vpop.f32.mrf.mxu0
      %1798 = vmatprep.mubr.bf16.mxu0 %v787
      %1799 = vmatmul.mubr.bf16.gmra.mxu0 %v786
      %v1800 = vpop.f32.mrf.mxu0
      %v1801 = vadd.f32 %v1704, %v1800
      %v1802 = vpop.f32.mrf.mxu0
      %v1803 = vpop.f32.mrf.mxu0
      %v1804 = vadd.f32 %v1707, %v1803
      %v1805 = vpop.f32.mrf.mxu0
      %1806 = vmatprep.mubr.bf16.mxu0 %v795
      %1807 = vmatmul.mubr.bf16.gmra.mxu0 %v794
      %v1808 = vpop.f32.mrf.mxu0
      %v1809 = vadd.f32 %v1712, %v1808
      %v1810 = vpop.f32.mrf.mxu0
      %v1811 = vpop.f32.mrf.mxu0
      %v1812 = vadd.f32 %v1715, %v1811
      %v1813 = vpop.f32.mrf.mxu0
      %1814 = vmatprep.mubr.bf16.mxu0 %v803
      %1815 = vmatmul.mubr.bf16.gmra.mxu0 %v802
      %v1816 = vpop.f32.mrf.mxu0
      %v1817 = vadd.f32 %v1720, %v1816
      %v1818 = vpop.f32.mrf.mxu0
      %v1819 = vpop.f32.mrf.mxu0
      %v1820 = vadd.f32 %v1723, %v1819
      %v1821 = vpop.f32.mrf.mxu0
      %1822 = vmatprep.mubr.bf16.mxu0 %v811
      %1823 = vmatmul.mubr.bf16.gmra.mxu0 %v810
      %v1824 = vpop.f32.mrf.mxu0
      %v1825 = vadd.f32 %v1728, %v1824
      %v1826 = vpop.f32.mrf.mxu0
      %v1827 = vpop.f32.mrf.mxu0
      %v1828 = vadd.f32 %v1731, %v1827
      %v1829 = vpop.f32.mrf.mxu0
      %1830 = vmatprep.mubr.bf16.mxu0 %v819
      %1831 = vmatmul.mubr.bf16.gmra.mxu0 %v818
      %v1832 = vpop.f32.mrf.mxu0
      %v1833 = vadd.f32 %v1736, %v1832
      %v1834 = vpop.f32.mrf.mxu0
      %v1835 = vpop.f32.mrf.mxu0
      %v1836 = vadd.f32 %v1739, %v1835
      %v1837 = vpop.f32.mrf.mxu0
      %1838 = vmatprep.mubr.bf16.mxu0 %v827
      %1839 = vmatmul.mubr.bf16.gmra.mxu0 %v826
      %v1840 = vpop.f32.mrf.mxu0
      %v1841 = vadd.f32 %v1744, %v1840
      %v1842 = vpop.f32.mrf.mxu0
      %v1843 = vpop.f32.mrf.mxu0
      %v1844 = vadd.f32 %v1747, %v1843
      %v1845 = vpop.f32.mrf.mxu0
      %1846 = vmatprep.mubr.bf16.mxu0 %v835
      %1847 = vmatmul.mubr.bf16.gmra.mxu0 %v834
      %v1848 = vpop.f32.mrf.mxu0
      %v1849 = vadd.f32 %v1752, %v1848
      %v1850 = vpop.f32.mrf.mxu0
      %v1851 = vpop.f32.mrf.mxu0
      %v1852 = vadd.f32 %v1755, %v1851
      %v1853 = vpop.f32.mrf.mxu0
      %1854 = vdwg.mxu0
      %v1855 = vld [vmem:[%s4] sm:$0x1]
      %v1857 = vlaneseq
      %v1858 = vshrl.u32 %v1857, 7
      %v1859 = vsub.s32 0, %v1858
      %v1860 = vrot.slane %v1855, %v1859
      %v1862 = vadd.f32 %v1793, %v1860
      %v1863 = vadd.f32 %v1796, %v1860
      %v1864 = vadd.f32 %v1801, %v1860
      %v1865 = vadd.f32 %v1804, %v1860
      %v1866 = vadd.f32 %v1809, %v1860
      %v1867 = vadd.f32 %v1812, %v1860
      %v1868 = vadd.f32 %v1817, %v1860
      %v1869 = vadd.f32 %v1820, %v1860
      %v1870 = vadd.f32 %v1825, %v1860
      %v1871 = vadd.f32 %v1828, %v1860
      %v1872 = vadd.f32 %v1833, %v1860
      %v1873 = vadd.f32 %v1836, %v1860
      %v1874 = vadd.f32 %v1841, %v1860
      %v1875 = vadd.f32 %v1844, %v1860
      %v1876 = vadd.f32 %v1849, %v1860
      %v1877 = vadd.f32 %v1852, %v1860
      %vm1878 = vcmask 261120
      %1879 = vst.msk [vmem:[%s248] sm:$0xff] %vm1878, %v1862
      %1880 = vst.msk [vmem:[%s248 + $0x8] sm:$0xff] %vm1878, %v1863
      %1881 = vst.msk [vmem:[%s248 + $0x10] sm:$0xff] %vm1878, %v1864
      %1882 = vst.msk [vmem:[%s248 + $0x18] sm:$0xff] %vm1878, %v1865
      %1883 = vst.msk [vmem:[%s248 + $0x20] sm:$0xff] %vm1878, %v1866
      %1884 = vst.msk [vmem:[%s248 + $0x28] sm:$0xff] %vm1878, %v1867
      %1885 = vst.msk [vmem:[%s248 + $0x30] sm:$0xff] %vm1878, %v1868
      %1886 = vst.msk [vmem:[%s248 + $0x38] sm:$0xff] %vm1878, %v1869
      %1887 = vst.msk [vmem:[%s248 + $0x40] sm:$0xff] %vm1878, %v1870
      %1888 = vst.msk [vmem:[%s248 + $0x48] sm:$0xff] %vm1878, %v1871
      %1889 = vst.msk [vmem:[%s248 + $0x50] sm:$0xff] %vm1878, %v1872
      %1890 = vst.msk [vmem:[%s248 + $0x58] sm:$0xff] %vm1878, %v1873
      %1891 = vst.msk [vmem:[%s248 + $0x60] sm:$0xff] %vm1878, %v1874
      %1892 = vst.msk [vmem:[%s248 + $0x68] sm:$0xff] %vm1878, %v1875
      %1893 = vst.msk [vmem:[%s248 + $0x70] sm:$0xff] %vm1878, %v1876
      %1894 = vst.msk [vmem:[%s248 + $0x78] sm:$0xff] %vm1878, %v1877
      %s1895 = smul.u32 16, %s16
      %p1896 = scmp.lt.s32.totalorder %s1895, 63
      %s1897 = scalar_select %p1896, %s1895, 63
      %s1898 = smul.addr %s1897, 8
      %s1899 = scalar_lea.vmem %s5, %s1898
      // Predicated region
      $region41: #{tpu_custom_call.1} parent=39 // pred_check
        %p1900 = pneg %p149
      $region42: #{tpu_custom_call.1} parent=39 // pred_check_branch
        %1902 = sbr.rel (%p1900) target = $region44
      $region43: #{tpu_custom_call.1} parent=39 // pred_region
        %s1903 = smul.u32 16, %s16
      $region44: #{tpu_custom_call.1} parent=39 // pred_fallthru
        _
    $region40: #{tpu_custom_call.1} parent=5 // pred_fallthru
      _
    %p1904 = scmp.le.s32.totalorder 2, %s11
    // Predicated region
    $region45: #{tpu_custom_call.1} parent=5 // pred_check
      %p1905 = pneg %p1904
    $region46: #{tpu_custom_call.1} parent=5 // pred_check_branch
      %1907 = sbr.rel (%p1905) target = $region48
    $region47: #{tpu_custom_call.1} parent=5 // pred_region
      %s1908 = ssub.s32 %s11, 2
      // Predicated region
      $region49: #{tpu_custom_call.1} parent=47 // pred_check
        %p1909 = pneg %p155
      $region50: #{tpu_custom_call.1} parent=47 // pred_check_branch
        %1911 = sbr.rel (%p1909) target = $region52
      $region51: #{tpu_custom_call.1} parent=47 // pred_region
        %s1912 = smul.u32 16, %s17
        %p1913 = scmp.lt.s32.totalorder %s1912, 63
        %s1914 = scalar_select %p1913, %s1912, 63
        %s1915 = smul.addr %s1914, 8
        %s1916 = scalar_lea.vmem %s5, %s1915
      $region52: #{tpu_custom_call.1} parent=47 // pred_fallthru
        _
    $region48: #{tpu_custom_call.1} parent=5 // pred_fallthru
      _
  $region6: #{tpu_custom_call.1} parent=0 // loop_footer
    %s15 = sadd.s32 1, %s11
  $region7: #{tpu_custom_call.1} parent=0 // loop_footer_branch
    %10 = sbr.rel target = $region3
  $region8: #{tpu_custom_call.1} parent=0 // loop_exit
    _

</llo_original>
